<compile_context>
chip_gen: v5e
topology: v5e:2x2
jax: 0.10.0
libtpu: 0.0.40
codegen_flags: <defaults>
</compile_context>

<pallas_src>
import math

import jax
import jax.numpy as jnp
from jax.experimental import pallas as pl
from jax.experimental.pallas import tpu as pltpu


def mha_kernel(qp_ref, k_ref, v_ref,
               wkT_ref, bk_ref, wvT_ref, bv_ref, woT_ref, bo_ref,
               seg_ref, segT_ref, out_ref):
    f32 = jnp.float32
    bf16 = jnp.bfloat16
    Bblk, L, d_model = k_ref.shape
    hidden = wkT_ref.shape[1]
    heads = seg_ref.shape[1]
    M = Bblk * L

    # --- K / V projections: bf16 operands on the MXU, f32 accumulation.
    # k/v arrive as bf16 from the wrapper; the leading-dim merge is cheap and
    # tile-aligned for the f32 intermediates below when L % 8 == 0.
    kflat = k_ref[...].reshape(M, d_model)
    vflat = v_ref[...].reshape(M, d_model)
    K = jnp.dot(kflat, wkT_ref[...], preferred_element_type=f32) + bk_ref[...]
    V = jnp.dot(vflat, wvT_ref[...], preferred_element_type=f32) + bv_ref[...]

    # --- Per-head scores.  Q was projected AND pre-scaled by 1/sqrt(d_k) in the
    # wrapper; broadcast it over each batch's L positions (VPU), then reduce each
    # head's d_k slice with the exact 0/1 block-diagonal seg matrix (bf16 MXU,
    # f32 accumulation).
    qk = K.reshape(Bblk, L, hidden) * qp_ref[...]              # (Bblk, L, hidden) f32
    scores = jnp.dot(qk.reshape(M, hidden).astype(bf16), seg_ref[...],
                     preferred_element_type=f32)               # (M, heads)
    scores = scores.reshape(Bblk, L, heads)

    # --- Softmax over the sequence axis (per batch, per head), f32 statistics;
    # the reciprocal lowers to the otherwise-idle EUP slot.
    m = jnp.max(scores, axis=1, keepdims=True)
    e = jnp.exp(scores - m)
    s = jnp.sum(e, axis=1, keepdims=True)
    attn = e * pl.reciprocal(s, approx=True)                   # (Bblk, L, heads)

    # TODO(synk): mask path (masked_fill_) not implemented; valid for mask=None.
    # TODO(synk): dropout treated as identity (eval / inference mode).

    # --- Broadcast each head's weight across its d_k lanes (== .repeat(1,1,1,d_k)),
    # elementwise-multiply with V (== scores * v), project back to d_model.
    attn_exp = jnp.dot(attn.reshape(M, heads).astype(bf16), segT_ref[...],
                       preferred_element_type=f32)             # (M, hidden)
    concat = (attn_exp * V).astype(bf16)
    out = jnp.dot(concat, woT_ref[...], preferred_element_type=f32) + bo_ref[...]
    out_ref[...] = out.reshape(Bblk, L, d_model).astype(out_ref.dtype)


def _vmem_limit_bytes():
    """~75% of physical VMEM (96 MiB on v5e/v6e, 48 MiB on v7x); conservative
    48 MiB (safe on every generation) if the hardware query is unavailable."""
    try:
        cap = int(pltpu.get_tpu_info().vmem_capacity_bytes)
    except Exception:
        cap = 0
    if cap <= 0:
        return 48 * 1024 * 1024
    return max(32 * 1024 * 1024, (cap * 3) // 4)


def _pick_batch_block(bs, L, target_m):
    """Largest divisor of bs with Bblk*L <= target_m (amortizes per-step
    overhead / weight re-push), while preferring >= 4 grid steps (v7x dual-TC
    keeps a real prefetch/writeback pipeline per core), else >= 2."""
    divisors = [d for d in range(1, bs + 1) if bs % d == 0]
    best = 1
    for d in divisors:
        if d * L <= max(target_m, L):
            best = d
    for min_steps in (4, 2):
        if bs // best >= min_steps:
            break
        for d in reversed(divisors):
            if d <= best and bs // d >= min_steps:
                best = d
                break
    return best


def mha_attn(q, k, v, Wq, bq, Wk, bk, Wv, bv, Wo, bo, *, heads):
    bs, Lq, d_model = q.shape
    _, L, _ = k.shape
    hidden = Wq.shape[0]
    assert Lq == 1, "MHAttn's broadcast requires a single query vector per batch"
    assert hidden % heads == 0, "hidden must equal heads * d_k (head-major layout)"
    d_k = hidden // heads
    f32, bf16 = jnp.float32, jnp.bfloat16

    # Degenerate (M=1) Q projection hoisted out of the kernel (one batched XLA
    # matmul); fold the 1/sqrt(d_k) score scale into it here (exact, in f32).
    scale = 1.0 / math.sqrt(d_k)
    Qp = ((jnp.dot(q.reshape(bs, d_model), Wq.T) + jnp.reshape(bq, (1, hidden)))
          * scale).reshape(bs, 1, hidden).astype(f32)

    # bf16 MXU operands (f32 accumulation happens in-kernel via
    # preferred_element_type); also halves HBM traffic and resident-weight VMEM.
    kb = k.astype(bf16)
    vb = v.astype(bf16)
    WkT = jnp.asarray(Wk.T, dtype=bf16)                       # (d_model, hidden)
    WvT = jnp.asarray(Wv.T, dtype=bf16)                       # (d_model, hidden)
    WoT = jnp.asarray(Wo.T, dtype=bf16)                       # (hidden, d_model)
    bk_ = jnp.asarray(bk, dtype=f32).reshape(1, hidden)
    bv_ = jnp.asarray(bv, dtype=f32).reshape(1, hidden)
    bo_ = jnp.asarray(bo, dtype=f32).reshape(1, d_model)

    # Block-diagonal head-membership matrix (hidden is head-major, d_k minor).
    # Exact 0/1 entries, so bf16 is lossless; resident via a constant index_map.
    seg_bool = (jnp.arange(hidden)[:, None] // d_k == jnp.arange(heads)[None, :])
    seg = jnp.asarray(seg_bool, dtype=bf16)                   # (hidden, heads)
    segT = jnp.asarray(seg_bool.T, dtype=bf16)                # (heads, hidden)

    vmem_limit = _vmem_limit_bytes()
    target_m = 1024 if vmem_limit >= 80 * 1024 * 1024 else 512
    bblk = _pick_batch_block(bs, L, target_m)
    grid = (bs // bblk,)

    def build(single_buffer_consts):
        def const_spec(arr):
            nd = arr.ndim
            if single_buffer_consts:
                # Constant blocks are never re-fetched: single-buffer them to
                # halve resident-constant VMEM (matters most on v7x's 64 MiB).
                return pl.BlockSpec(arr.shape, lambda b, _n=nd: (0,) * _n,
                                    pipeline_mode=pl.Buffered(1))
            return pl.BlockSpec(arr.shape, lambda b, _n=nd: (0,) * _n)

        return pl.pallas_call(
            mha_kernel,
            out_shape=jax.ShapeDtypeStruct((bs, L, d_model), q.dtype),
            grid=grid,
            in_specs=[
                pl.BlockSpec((bblk, 1, hidden), lambda b: (b, 0, 0)),    # Qp
                pl.BlockSpec((bblk, L, d_model), lambda b: (b, 0, 0)),   # k (bf16)
                pl.BlockSpec((bblk, L, d_model), lambda b: (b, 0, 0)),   # v (bf16)
                const_spec(WkT), const_spec(bk_),
                const_spec(WvT), const_spec(bv_),
                const_spec(WoT), const_spec(bo_),
                const_spec(seg), const_spec(segT),
            ],
            out_specs=pl.BlockSpec((bblk, L, d_model), lambda b: (b, 0, 0)),
            compiler_params=pltpu.CompilerParams(
                dimension_semantics=("parallel",),
                vmem_limit_bytes=vmem_limit,
            ),
        )

    args = (Qp, kb, vb, WkT, bk_, WvT, bv_, WoT, bo_, seg, segT)
    try:
        return build(True)(*args)
    except Exception:
        # Fallback for jax versions without pipeline_mode / Buffered(1) support
        # on the top-level TPU pipeline: default double-buffered constants.
        return build(False)(*args)


def mha_ref(q, k, v, Wq, bq, Wk, bk, Wv, bv, Wo, bo, *, heads):
    """Pure-JAX (f32) transcription of the PyTorch forward (mask=None, eval)."""
    bs = q.shape[0]
    hidden = Wq.shape[0]
    d_k = hidden // heads
    Q = q @ Wq.T + bq
    K = k @ Wk.T + bk
    V = v @ Wv.T + bv
    Qh = Q.reshape(bs, -1, heads, d_k).transpose(0, 2, 1, 3)   # (bs, h, 1, d_k)
    Kh = K.reshape(bs, -1, heads, d_k).transpose(0, 2, 1, 3)   # (bs, h, L, d_k)
    Vh = V.reshape(bs, -1, heads, d_k).transpose(0, 2, 1, 3)   # (bs, h, L, d_k)
    scores = jnp.einsum('bhqd,bhkd->bhqk', Qh, Kh) / math.sqrt(d_k)
    scores = jax.nn.softmax(scores, axis=-1)                   # (bs, h, 1, L)
    scores = jnp.swapaxes(scores, -2, -1)                      # (bs, h, L, 1)
    scores = jnp.tile(scores, (1, 1, 1, d_k))                  # (bs, h, L, d_k)
    out_h = scores * Vh                                        # (bs, h, L, d_k)
    concat = out_h.transpose(0, 2, 1, 3).reshape(bs, -1, heads * d_k)
    return concat @ Wo.T + bo


if __name__ == "__main__":
    bs, L, d_model, hidden, heads = 2, 8, 32, 32, 4

    key = jax.random.PRNGKey(0)
    ks = jax.random.split(key, 12)

    def linear_init(kw, kb, out_f, in_f):
        bound = 1.0 / math.sqrt(in_f)
        W = jax.random.uniform(kw, (out_f, in_f), jnp.float32, -bound, bound)
        b = jax.random.uniform(kb, (1, out_f), jnp.float32, -bound, bound)
        return W, b

    Wq, bq = linear_init(ks[0], ks[1], hidden, d_model)
    Wk, bk = linear_init(ks[2], ks[3], hidden, d_model)
    Wv, bv = linear_init(ks[4], ks[5], hidden, d_model)
    Wo, bo = linear_init(ks[6], ks[7], d_model, hidden)

    q = jax.random.normal(ks[8], (bs, 1, d_model), jnp.float32)
    k = jax.random.normal(ks[9], (bs, L, d_model), jnp.float32)
    v = jax.random.normal(ks[10], (bs, L, d_model), jnp.float32)

    out = mha_attn(q, k, v, Wq, bq, Wk, bk, Wv, bv, Wo, bo, heads=heads)
    out = jax.block_until_ready(out)

    ref = mha_ref(q, k, v, Wq, bq, Wk, bk, Wv, bv, Wo, bo, heads=heads)
    assert out.shape == (bs, L, d_model)
    # bf16 MXU operands + approx reciprocal vs. the pure-f32 reference.
    assert jnp.allclose(out, ref, atol=3e-2, rtol=3e-2), "mismatch vs reference"

    print("KERNEL_OK")
</pallas_src>

<mosaic_0001>
module attributes {stable_mosaic.version = 11 : i64} {
  func.func @mha_kernel(%arg0: i32, %arg1: memref<1x1x32xf32, #tpu.memory_space<vmem>>, %arg2: memref<1x8x32xbf16, #tpu.memory_space<vmem>>, %arg3: memref<1x8x32xbf16, #tpu.memory_space<vmem>>, %arg4: memref<32x32xbf16, #tpu.memory_space<vmem>>, %arg5: memref<1x32xf32, #tpu.memory_space<vmem>>, %arg6: memref<32x32xbf16, #tpu.memory_space<vmem>>, %arg7: memref<1x32xf32, #tpu.memory_space<vmem>>, %arg8: memref<32x32xbf16, #tpu.memory_space<vmem>>, %arg9: memref<1x32xf32, #tpu.memory_space<vmem>>, %arg10: memref<32x4xbf16, #tpu.memory_space<vmem>>, %arg11: memref<4x32xbf16, #tpu.memory_space<vmem>>, %arg12: memref<1x8x32xf32, #tpu.memory_space<vmem>>) attributes {dimension_semantics = [#tpu.dimension_semantics<parallel>], iteration_bounds = array<i64: 2>, scalar_prefetch = 0 : i64, scratch_operands = 0 : i64, tpu.core_type = #tpu.core_type<tc>, window_params = [{transform_indices = @transform_0, window_bounds = array<i64: 1, 1, 32>}, {transform_indices = @transform_1, window_bounds = array<i64: 1, 8, 32>}, {transform_indices = @transform_2, window_bounds = array<i64: 1, 8, 32>}, {pipeline_mode = #tpu.pipeline_mode<synchronous>, transform_indices = @transform_3, window_bounds = array<i64: 32, 32>}, {pipeline_mode = #tpu.pipeline_mode<synchronous>, transform_indices = @transform_4, window_bounds = array<i64: 1, 32>}, {pipeline_mode = #tpu.pipeline_mode<synchronous>, transform_indices = @transform_5, window_bounds = array<i64: 32, 32>}, {pipeline_mode = #tpu.pipeline_mode<synchronous>, transform_indices = @transform_6, window_bounds = array<i64: 1, 32>}, {pipeline_mode = #tpu.pipeline_mode<synchronous>, transform_indices = @transform_7, window_bounds = array<i64: 32, 32>}, {pipeline_mode = #tpu.pipeline_mode<synchronous>, transform_indices = @transform_8, window_bounds = array<i64: 1, 32>}, {pipeline_mode = #tpu.pipeline_mode<synchronous>, transform_indices = @transform_9, window_bounds = array<i64: 32, 4>}, {pipeline_mode = #tpu.pipeline_mode<synchronous>, transform_indices = @transform_10, window_bounds = array<i64: 4, 32>}, {transform_indices = @transform_11, window_bounds = array<i64: 1, 8, 32>}]} {
    %c0 = arith.constant 0 : index
    %c0_0 = arith.constant 0 : index
    %c0_1 = arith.constant 0 : index
    %0 = vector.load %arg2[%c0, %c0_0, %c0_1] : memref<1x8x32xbf16, #tpu.memory_space<vmem>>, vector<1x8x32xbf16>
    %1 = vector.shape_cast %0 : vector<1x8x32xbf16> to vector<8x32xbf16>
    %c0_2 = arith.constant 0 : index
    %c0_3 = arith.constant 0 : index
    %c0_4 = arith.constant 0 : index
    %2 = vector.load %arg3[%c0_2, %c0_3, %c0_4] : memref<1x8x32xbf16, #tpu.memory_space<vmem>>, vector<1x8x32xbf16>
    %3 = vector.shape_cast %2 : vector<1x8x32xbf16> to vector<8x32xbf16>
    %c0_5 = arith.constant 0 : index
    %c0_6 = arith.constant 0 : index
    %4 = vector.load %arg4[%c0_5, %c0_6] : memref<32x32xbf16, #tpu.memory_space<vmem>>, vector<32x32xbf16>
    %cst = arith.constant dense<0.000000e+00> : vector<8x32xf32>
    %5 = tpu.matmul %1, %4, %cst {dimension_numbers = #tpu.dot_dimension_numbers<[1], [0], [0], [1], [0, 0, 1, 1], [], []>} : vector<8x32xbf16>, vector<32x32xbf16>, vector<8x32xf32> -> vector<8x32xf32>
    %c0_7 = arith.constant 0 : index
    %c0_8 = arith.constant 0 : index
    %6 = vector.load %arg5[%c0_7, %c0_8] : memref<1x32xf32, #tpu.memory_space<vmem>>, vector<1x32xf32>
    %7 = vector.broadcast %6 : vector<1x32xf32> to vector<8x32xf32>
    %8 = arith.addf %5, %7 : vector<8x32xf32>
    %c0_9 = arith.constant 0 : index
    %c0_10 = arith.constant 0 : index
    %9 = vector.load %arg6[%c0_9, %c0_10] : memref<32x32xbf16, #tpu.memory_space<vmem>>, vector<32x32xbf16>
    %cst_11 = arith.constant dense<0.000000e+00> : vector<8x32xf32>
    %10 = tpu.matmul %3, %9, %cst_11 {dimension_numbers = #tpu.dot_dimension_numbers<[1], [0], [0], [1], [0, 0, 1, 1], [], []>} : vector<8x32xbf16>, vector<32x32xbf16>, vector<8x32xf32> -> vector<8x32xf32>
    %c0_12 = arith.constant 0 : index
    %c0_13 = arith.constant 0 : index
    %11 = vector.load %arg7[%c0_12, %c0_13] : memref<1x32xf32, #tpu.memory_space<vmem>>, vector<1x32xf32>
    %12 = vector.broadcast %11 : vector<1x32xf32> to vector<8x32xf32>
    %13 = arith.addf %10, %12 : vector<8x32xf32>
    %14 = vector.shape_cast %8 : vector<8x32xf32> to vector<1x8x32xf32>
    %c0_14 = arith.constant 0 : index
    %c0_15 = arith.constant 0 : index
    %c0_16 = arith.constant 0 : index
    %15 = vector.load %arg1[%c0_14, %c0_15, %c0_16] : memref<1x1x32xf32, #tpu.memory_space<vmem>>, vector<1x1x32xf32>
    %16 = vector.broadcast %15 : vector<1x1x32xf32> to vector<1x8x32xf32>
    %17 = arith.mulf %14, %16 : vector<1x8x32xf32>
    %18 = vector.shape_cast %17 : vector<1x8x32xf32> to vector<8x32xf32>
    %19 = arith.truncf %18 : vector<8x32xf32> to vector<8x32xbf16>
    %c0_17 = arith.constant 0 : index
    %c0_18 = arith.constant 0 : index
    %20 = vector.load %arg10[%c0_17, %c0_18] : memref<32x4xbf16, #tpu.memory_space<vmem>>, vector<32x4xbf16>
    %cst_19 = arith.constant dense<0.000000e+00> : vector<8x4xf32>
    %21 = tpu.matmul %19, %20, %cst_19 {dimension_numbers = #tpu.dot_dimension_numbers<[1], [0], [0], [1], [0, 0, 1, 1], [], []>} : vector<8x32xbf16>, vector<32x4xbf16>, vector<8x4xf32> -> vector<8x4xf32>
    %22 = vector.shape_cast %21 : vector<8x4xf32> to vector<1x8x4xf32>
    %cst_20 = arith.constant dense<0xFF800000> : vector<1x4xf32>
    %23 = vector.multi_reduction <maximumf>, %22, %cst_20 [1] : vector<1x8x4xf32> to vector<1x4xf32>
    %24 = vector.shape_cast %23 : vector<1x4xf32> to vector<1x1x4xf32>
    %25 = vector.broadcast %24 : vector<1x1x4xf32> to vector<1x8x4xf32>
    %26 = arith.subf %22, %25 : vector<1x8x4xf32>
    %27 = math.exp %26 : vector<1x8x4xf32>
    %cst_21 = arith.constant dense<0.000000e+00> : vector<1x4xf32>
    %28 = vector.multi_reduction <add>, %27, %cst_21 [1] : vector<1x8x4xf32> to vector<1x4xf32>
    %29 = vector.shape_cast %28 : vector<1x4xf32> to vector<1x1x4xf32>
    %30 = tpu.reciprocal %29 {approx = true} : vector<1x1x4xf32> -> vector<1x1x4xf32>
    %31 = vector.broadcast %30 : vector<1x1x4xf32> to vector<1x8x4xf32>
    %32 = arith.mulf %27, %31 : vector<1x8x4xf32>
    %33 = vector.shape_cast %32 : vector<1x8x4xf32> to vector<8x4xf32>
    %34 = arith.truncf %33 : vector<8x4xf32> to vector<8x4xbf16>
    %c0_22 = arith.constant 0 : index
    %c0_23 = arith.constant 0 : index
    %35 = vector.load %arg11[%c0_22, %c0_23] : memref<4x32xbf16, #tpu.memory_space<vmem>>, vector<4x32xbf16>
    %cst_24 = arith.constant dense<0.000000e+00> : vector<8x32xf32>
    %36 = tpu.matmul %34, %35, %cst_24 {dimension_numbers = #tpu.dot_dimension_numbers<[1], [0], [0], [1], [0, 0, 1, 1], [], []>} : vector<8x4xbf16>, vector<4x32xbf16>, vector<8x32xf32> -> vector<8x32xf32>
    %37 = arith.mulf %36, %13 : vector<8x32xf32>
    %38 = arith.truncf %37 : vector<8x32xf32> to vector<8x32xbf16>
    %c0_25 = arith.constant 0 : index
    %c0_26 = arith.constant 0 : index
    %39 = vector.load %arg8[%c0_25, %c0_26] : memref<32x32xbf16, #tpu.memory_space<vmem>>, vector<32x32xbf16>
    %cst_27 = arith.constant dense<0.000000e+00> : vector<8x32xf32>
    %40 = tpu.matmul %38, %39, %cst_27 {dimension_numbers = #tpu.dot_dimension_numbers<[1], [0], [0], [1], [0, 0, 1, 1], [], []>} : vector<8x32xbf16>, vector<32x32xbf16>, vector<8x32xf32> -> vector<8x32xf32>
    %c0_28 = arith.constant 0 : index
    %c0_29 = arith.constant 0 : index
    %41 = vector.load %arg9[%c0_28, %c0_29] : memref<1x32xf32, #tpu.memory_space<vmem>>, vector<1x32xf32>
    %42 = vector.broadcast %41 : vector<1x32xf32> to vector<8x32xf32>
    %43 = arith.addf %40, %42 : vector<8x32xf32>
    %44 = vector.shape_cast %43 : vector<8x32xf32> to vector<1x8x32xf32>
    %c0_30 = arith.constant 0 : index
    %c0_31 = arith.constant 0 : index
    %c0_32 = arith.constant 0 : index
    %45 = vector.load %arg12[%c0_30, %c0_31, %c0_32] : memref<1x8x32xf32, #tpu.memory_space<vmem>>, vector<1x8x32xf32>
    tpu.vector_store %arg12[%c0_30, %c0_31, %c0_32], %44 {strides = array<i32>} : memref<1x8x32xf32, #tpu.memory_space<vmem>>, vector<1x8x32xf32>,
    return
  }
  func.func @transform_0(%arg0: i32) -> (i32, i32, i32) {
    %c0_i32 = arith.constant 0 : i32
    %c0_i32_0 = arith.constant 0 : i32
    %c0_i32_1 = arith.constant 0 : i32
    return %arg0, %c0_i32, %c0_i32_0 : i32, i32, i32
  }
  func.func @transform_1(%arg0: i32) -> (i32, i32, i32) {
    %c0_i32 = arith.constant 0 : i32
    %c0_i32_0 = arith.constant 0 : i32
    %c0_i32_1 = arith.constant 0 : i32
    return %arg0, %c0_i32, %c0_i32_0 : i32, i32, i32
  }
  func.func @transform_2(%arg0: i32) -> (i32, i32, i32) {
    %c0_i32 = arith.constant 0 : i32
    %c0_i32_0 = arith.constant 0 : i32
    %c0_i32_1 = arith.constant 0 : i32
    return %arg0, %c0_i32, %c0_i32_0 : i32, i32, i32
  }
  func.func @transform_3(%arg0: i32) -> (i32, i32) {
    %c0_i32 = arith.constant 0 : i32
    %c0_i32_0 = arith.constant 0 : i32
    %c0_i32_1 = arith.constant 0 : i32
    return %c0_i32, %c0_i32_0 : i32, i32
  }
  func.func @transform_4(%arg0: i32) -> (i32, i32) {
    %c0_i32 = arith.constant 0 : i32
    %c0_i32_0 = arith.constant 0 : i32
    %c0_i32_1 = arith.constant 0 : i32
    return %c0_i32, %c0_i32_0 : i32, i32
  }
  func.func @transform_5(%arg0: i32) -> (i32, i32) {
    %c0_i32 = arith.constant 0 : i32
    %c0_i32_0 = arith.constant 0 : i32
    %c0_i32_1 = arith.constant 0 : i32
    return %c0_i32, %c0_i32_0 : i32, i32
  }
  func.func @transform_6(%arg0: i32) -> (i32, i32) {
    %c0_i32 = arith.constant 0 : i32
    %c0_i32_0 = arith.constant 0 : i32
    %c0_i32_1 = arith.constant 0 : i32
    return %c0_i32, %c0_i32_0 : i32, i32
  }
  func.func @transform_7(%arg0: i32) -> (i32, i32) {
    %c0_i32 = arith.constant 0 : i32
    %c0_i32_0 = arith.constant 0 : i32
    %c0_i32_1 = arith.constant 0 : i32
    return %c0_i32, %c0_i32_0 : i32, i32
  }
  func.func @transform_8(%arg0: i32) -> (i32, i32) {
    %c0_i32 = arith.constant 0 : i32
    %c0_i32_0 = arith.constant 0 : i32
    %c0_i32_1 = arith.constant 0 : i32
    return %c0_i32, %c0_i32_0 : i32, i32
  }
  func.func @transform_9(%arg0: i32) -> (i32, i32) {
    %c0_i32 = arith.constant 0 : i32
    %c0_i32_0 = arith.constant 0 : i32
    %c0_i32_1 = arith.constant 0 : i32
    return %c0_i32, %c0_i32_0 : i32, i32
  }
  func.func @transform_10(%arg0: i32) -> (i32, i32) {
    %c0_i32 = arith.constant 0 : i32
    %c0_i32_0 = arith.constant 0 : i32
    %c0_i32_1 = arith.constant 0 : i32
    return %c0_i32, %c0_i32_0 : i32, i32
  }
  func.func @transform_11(%arg0: i32) -> (i32, i32, i32) {
    %c0_i32 = arith.constant 0 : i32
    %c0_i32_0 = arith.constant 0 : i32
    %c0_i32_1 = arith.constant 0 : i32
    return %arg0, %c0_i32, %c0_i32_0 : i32, i32, i32
  }
}

module attributes {stable_mosaic.version = 11 : i64} {
  func.func @mha_kernel(%arg0: i32, %arg1: memref<1x1x32xf32, #tpu.memory_space<vmem>>, %arg2: memref<1x8x32xbf16, #tpu.memory_space<vmem>>, %arg3: memref<1x8x32xbf16, #tpu.memory_space<vmem>>, %arg4: memref<32x32xbf16, #tpu.memory_space<vmem>>, %arg5: memref<1x32xf32, #tpu.memory_space<vmem>>, %arg6: memref<32x32xbf16, #tpu.memory_space<vmem>>, %arg7: memref<1x32xf32, #tpu.memory_space<vmem>>, %arg8: memref<32x32xbf16, #tpu.memory_space<vmem>>, %arg9: memref<1x32xf32, #tpu.memory_space<vmem>>, %arg10: memref<32x4xbf16, #tpu.memory_space<vmem>>, %arg11: memref<4x32xbf16, #tpu.memory_space<vmem>>, %arg12: memref<1x8x32xf32, #tpu.memory_space<vmem>>) attributes {dimension_semantics = [#tpu.dimension_semantics<parallel>], iteration_bounds = array<i64: 2>, scalar_prefetch = 0 : i64, scratch_operands = 0 : i64, tpu.core_type = #tpu.core_type<tc>, window_params = [{transform_indices = @transform_0, window_bounds = array<i64: 1, 1, 32>}, {transform_indices = @transform_1, window_bounds = array<i64: 1, 8, 32>}, {transform_indices = @transform_2, window_bounds = array<i64: 1, 8, 32>}, {pipeline_mode = #tpu.pipeline_mode<synchronous>, transform_indices = @transform_3, window_bounds = array<i64: 32, 32>}, {pipeline_mode = #tpu.pipeline_mode<synchronous>, transform_indices = @transform_4, window_bounds = array<i64: 1, 32>}, {pipeline_mode = #tpu.pipeline_mode<synchronous>, transform_indices = @transform_5, window_bounds = array<i64: 32, 32>}, {pipeline_mode = #tpu.pipeline_mode<synchronous>, transform_indices = @transform_6, window_bounds = array<i64: 1, 32>}, {pipeline_mode = #tpu.pipeline_mode<synchronous>, transform_indices = @transform_7, window_bounds = array<i64: 32, 32>}, {pipeline_mode = #tpu.pipeline_mode<synchronous>, transform_indices = @transform_8, window_bounds = array<i64: 1, 32>}, {pipeline_mode = #tpu.pipeline_mode<synchronous>, transform_indices = @transform_9, window_bounds = array<i64: 32, 4>}, {pipeline_mode = #tpu.pipeline_mode<synchronous>, transform_indices = @transform_10, window_bounds = array<i64: 4, 32>}, {transform_indices = @transform_11, window_bounds = array<i64: 1, 8, 32>}]} {
    %c0 = arith.constant 0 : index
    %c0_0 = arith.constant 0 : index
    %c0_1 = arith.constant 0 : index
    %0 = vector.load %arg2[%c0, %c0_0, %c0_1] : memref<1x8x32xbf16, #tpu.memory_space<vmem>>, vector<1x8x32xbf16>
    %1 = vector.shape_cast %0 : vector<1x8x32xbf16> to vector<8x32xbf16>
    %c0_2 = arith.constant 0 : index
    %c0_3 = arith.constant 0 : index
    %c0_4 = arith.constant 0 : index
    %2 = vector.load %arg3[%c0_2, %c0_3, %c0_4] : memref<1x8x32xbf16, #tpu.memory_space<vmem>>, vector<1x8x32xbf16>
    %3 = vector.shape_cast %2 : vector<1x8x32xbf16> to vector<8x32xbf16>
    %c0_5 = arith.constant 0 : index
    %c0_6 = arith.constant 0 : index
    %4 = vector.load %arg4[%c0_5, %c0_6] : memref<32x32xbf16, #tpu.memory_space<vmem>>, vector<32x32xbf16>
    %cst = arith.constant dense<0.000000e+00> : vector<8x32xf32>
    %5 = tpu.matmul %1, %4, %cst {dimension_numbers = #tpu.dot_dimension_numbers<[1], [0], [0], [1], [0, 0, 1, 1], [], []>} : vector<8x32xbf16>, vector<32x32xbf16>, vector<8x32xf32> -> vector<8x32xf32>
    %c0_7 = arith.constant 0 : index
    %c0_8 = arith.constant 0 : index
    %6 = vector.load %arg5[%c0_7, %c0_8] : memref<1x32xf32, #tpu.memory_space<vmem>>, vector<1x32xf32>
    %7 = vector.broadcast %6 : vector<1x32xf32> to vector<8x32xf32>
    %8 = arith.addf %5, %7 : vector<8x32xf32>
    %c0_9 = arith.constant 0 : index
    %c0_10 = arith.constant 0 : index
    %9 = vector.load %arg6[%c0_9, %c0_10] : memref<32x32xbf16, #tpu.memory_space<vmem>>, vector<32x32xbf16>
    %cst_11 = arith.constant dense<0.000000e+00> : vector<8x32xf32>
    %10 = tpu.matmul %3, %9, %cst_11 {dimension_numbers = #tpu.dot_dimension_numbers<[1], [0], [0], [1], [0, 0, 1, 1], [], []>} : vector<8x32xbf16>, vector<32x32xbf16>, vector<8x32xf32> -> vector<8x32xf32>
    %c0_12 = arith.constant 0 : index
    %c0_13 = arith.constant 0 : index
    %11 = vector.load %arg7[%c0_12, %c0_13] : memref<1x32xf32, #tpu.memory_space<vmem>>, vector<1x32xf32>
    %12 = vector.broadcast %11 : vector<1x32xf32> to vector<8x32xf32>
    %13 = arith.addf %10, %12 : vector<8x32xf32>
    %14 = vector.shape_cast %8 : vector<8x32xf32> to vector<1x8x32xf32>
    %c0_14 = arith.constant 0 : index
    %c0_15 = arith.constant 0 : index
    %c0_16 = arith.constant 0 : index
    %15 = vector.load %arg1[%c0_14, %c0_15, %c0_16] : memref<1x1x32xf32, #tpu.memory_space<vmem>>, vector<1x1x32xf32>
    %16 = vector.broadcast %15 : vector<1x1x32xf32> to vector<1x8x32xf32>
    %17 = arith.mulf %14, %16 : vector<1x8x32xf32>
    %18 = vector.shape_cast %17 : vector<1x8x32xf32> to vector<8x32xf32>
    %19 = arith.truncf %18 : vector<8x32xf32> to vector<8x32xbf16>
    %c0_17 = arith.constant 0 : index
    %c0_18 = arith.constant 0 : index
    %20 = vector.load %arg10[%c0_17, %c0_18] : memref<32x4xbf16, #tpu.memory_space<vmem>>, vector<32x4xbf16>
    %cst_19 = arith.constant dense<0.000000e+00> : vector<8x4xf32>
    %21 = tpu.matmul %19, %20, %cst_19 {dimension_numbers = #tpu.dot_dimension_numbers<[1], [0], [0], [1], [0, 0, 1, 1], [], []>} : vector<8x32xbf16>, vector<32x4xbf16>, vector<8x4xf32> -> vector<8x4xf32>
    %22 = vector.shape_cast %21 : vector<8x4xf32> to vector<1x8x4xf32>
    %cst_20 = arith.constant dense<0xFF800000> : vector<1x4xf32>
    %23 = vector.multi_reduction <maximumf>, %22, %cst_20 [1] : vector<1x8x4xf32> to vector<1x4xf32>
    %24 = vector.shape_cast %23 : vector<1x4xf32> to vector<1x1x4xf32>
    %25 = vector.broadcast %24 : vector<1x1x4xf32> to vector<1x8x4xf32>
    %26 = arith.subf %22, %25 : vector<1x8x4xf32>
    %27 = math.exp %26 : vector<1x8x4xf32>
    %cst_21 = arith.constant dense<0.000000e+00> : vector<1x4xf32>
    %28 = vector.multi_reduction <add>, %27, %cst_21 [1] : vector<1x8x4xf32> to vector<1x4xf32>
    %29 = vector.shape_cast %28 : vector<1x4xf32> to vector<1x1x4xf32>
    %30 = tpu.reciprocal %29 {approx = true} : vector<1x1x4xf32> -> vector<1x1x4xf32>
    %31 = vector.broadcast %30 : vector<1x1x4xf32> to vector<1x8x4xf32>
    %32 = arith.mulf %27, %31 : vector<1x8x4xf32>
    %33 = vector.shape_cast %32 : vector<1x8x4xf32> to vector<8x4xf32>
    %34 = arith.truncf %33 : vector<8x4xf32> to vector<8x4xbf16>
    %c0_22 = arith.constant 0 : index
    %c0_23 = arith.constant 0 : index
    %35 = vector.load %arg11[%c0_22, %c0_23] : memref<4x32xbf16, #tpu.memory_space<vmem>>, vector<4x32xbf16>
    %cst_24 = arith.constant dense<0.000000e+00> : vector<8x32xf32>
    %36 = tpu.matmul %34, %35, %cst_24 {dimension_numbers = #tpu.dot_dimension_numbers<[1], [0], [0], [1], [0, 0, 1, 1], [], []>} : vector<8x4xbf16>, vector<4x32xbf16>, vector<8x32xf32> -> vector<8x32xf32>
    %37 = arith.mulf %36, %13 : vector<8x32xf32>
    %38 = arith.truncf %37 : vector<8x32xf32> to vector<8x32xbf16>
    %c0_25 = arith.constant 0 : index
    %c0_26 = arith.constant 0 : index
    %39 = vector.load %arg8[%c0_25, %c0_26] : memref<32x32xbf16, #tpu.memory_space<vmem>>, vector<32x32xbf16>
    %cst_27 = arith.constant dense<0.000000e+00> : vector<8x32xf32>
    %40 = tpu.matmul %38, %39, %cst_27 {dimension_numbers = #tpu.dot_dimension_numbers<[1], [0], [0], [1], [0, 0, 1, 1], [], []>} : vector<8x32xbf16>, vector<32x32xbf16>, vector<8x32xf32> -> vector<8x32xf32>
    %c0_28 = arith.constant 0 : index
    %c0_29 = arith.constant 0 : index
    %41 = vector.load %arg9[%c0_28, %c0_29] : memref<1x32xf32, #tpu.memory_space<vmem>>, vector<1x32xf32>
    %42 = vector.broadcast %41 : vector<1x32xf32> to vector<8x32xf32>
    %43 = arith.addf %40, %42 : vector<8x32xf32>
    %44 = vector.shape_cast %43 : vector<8x32xf32> to vector<1x8x32xf32>
    %c0_30 = arith.constant 0 : index
    %c0_31 = arith.constant 0 : index
    %c0_32 = arith.constant 0 : index
    %45 = vector.load %arg12[%c0_30, %c0_31, %c0_32] : memref<1x8x32xf32, #tpu.memory_space<vmem>>, vector<1x8x32xf32>
    tpu.vector_store %arg12[%c0_30, %c0_31, %c0_32], %44 {strides = array<i32>} : memref<1x8x32xf32, #tpu.memory_space<vmem>>, vector<1x8x32xf32>,
    return
  }
  func.func @transform_0(%arg0: i32) -> (i32, i32, i32) {
    %c0_i32 = arith.constant 0 : i32
    %c0_i32_0 = arith.constant 0 : i32
    %c0_i32_1 = arith.constant 0 : i32
    return %arg0, %c0_i32, %c0_i32_0 : i32, i32, i32
  }
  func.func @transform_1(%arg0: i32) -> (i32, i32, i32) {
    %c0_i32 = arith.constant 0 : i32
    %c0_i32_0 = arith.constant 0 : i32
    %c0_i32_1 = arith.constant 0 : i32
    return %arg0, %c0_i32, %c0_i32_0 : i32, i32, i32
  }
  func.func @transform_2(%arg0: i32) -> (i32, i32, i32) {
    %c0_i32 = arith.constant 0 : i32
    %c0_i32_0 = arith.constant 0 : i32
    %c0_i32_1 = arith.constant 0 : i32
    return %arg0, %c0_i32, %c0_i32_0 : i32, i32, i32
  }
  func.func @transform_3(%arg0: i32) -> (i32, i32) {
    %c0_i32 = arith.constant 0 : i32
    %c0_i32_0 = arith.constant 0 : i32
    %c0_i32_1 = arith.constant 0 : i32
    return %c0_i32, %c0_i32_0 : i32, i32
  }
  func.func @transform_4(%arg0: i32) -> (i32, i32) {
    %c0_i32 = arith.constant 0 : i32
    %c0_i32_0 = arith.constant 0 : i32
    %c0_i32_1 = arith.constant 0 : i32
    return %c0_i32, %c0_i32_0 : i32, i32
  }
  func.func @transform_5(%arg0: i32) -> (i32, i32) {
    %c0_i32 = arith.constant 0 : i32
    %c0_i32_0 = arith.constant 0 : i32
    %c0_i32_1 = arith.constant 0 : i32
    return %c0_i32, %c0_i32_0 : i32, i32
  }
  func.func @transform_6(%arg0: i32) -> (i32, i32) {
    %c0_i32 = arith.constant 0 : i32
    %c0_i32_0 = arith.constant 0 : i32
    %c0_i32_1 = arith.constant 0 : i32
    return %c0_i32, %c0_i32_0 : i32, i32
  }
  func.func @transform_7(%arg0: i32) -> (i32, i32) {
    %c0_i32 = arith.constant 0 : i32
    %c0_i32_0 = arith.constant 0 : i32
    %c0_i32_1 = arith.constant 0 : i32
    return %c0_i32, %c0_i32_0 : i32, i32
  }
  func.func @transform_8(%arg0: i32) -> (i32, i32) {
    %c0_i32 = arith.constant 0 : i32
    %c0_i32_0 = arith.constant 0 : i32
    %c0_i32_1 = arith.constant 0 : i32
    return %c0_i32, %c0_i32_0 : i32, i32
  }
  func.func @transform_9(%arg0: i32) -> (i32, i32) {
    %c0_i32 = arith.constant 0 : i32
    %c0_i32_0 = arith.constant 0 : i32
    %c0_i32_1 = arith.constant 0 : i32
    return %c0_i32, %c0_i32_0 : i32, i32
  }
  func.func @transform_10(%arg0: i32) -> (i32, i32) {
    %c0_i32 = arith.constant 0 : i32
    %c0_i32_0 = arith.constant 0 : i32
    %c0_i32_1 = arith.constant 0 : i32
    return %c0_i32, %c0_i32_0 : i32, i32
  }
  func.func @transform_11(%arg0: i32) -> (i32, i32, i32) {
    %c0_i32 = arith.constant 0 : i32
    %c0_i32_0 = arith.constant 0 : i32
    %c0_i32_1 = arith.constant 0 : i32
    return %arg0, %c0_i32, %c0_i32_0 : i32, i32, i32
  }
}

</mosaic_0001>

<llo_original>
// kernel: tpu_custom_call.1
$region0: #{tpu_custom_call.1}
  #allocation0 [shape = 'u32[]', space=smem, size = 0x4, offset = 0x4, fixed_abs, tag = 'smem constant byte address 0x4 - core index']
  #allocation1 [shape = 'u32[72,128]{1,0:T(1,128)}', space=vmem, size = 0x9000, scoped, tag = 'internal scratch']
  %s0 = inlined_call_operand.vmem [shape: f32[2,1,32], index: 0, kind: input, shape index: {}]
  %s1 = inlined_call_operand.hbm [shape: bf16[2,8,32], index: 1, kind: input, shape index: {}]
  %s2 = inlined_call_operand.hbm [shape: bf16[2,8,32], index: 2, kind: input, shape index: {}]
  %s3 = inlined_call_operand.vmem [shape: bf16[32,32], index: 3, kind: input, shape index: {}]
  %s4 = inlined_call_operand.hbm [shape: f32[1,32], index: 4, kind: input, shape index: {}]
  %s5 = inlined_call_operand.hbm [shape: bf16[32,32], index: 5, kind: input, shape index: {}]
  %s6 = inlined_call_operand.vmem [shape: f32[1,32], index: 6, kind: input, shape index: {}]
  %s7 = inlined_call_operand.hbm [shape: bf16[32,32], index: 7, kind: input, shape index: {}]
  %s8 = inlined_call_operand.vmem [shape: f32[1,32], index: 8, kind: input, shape index: {}]
  %s9 = inlined_call_operand.vmem [shape: bf16[32,4], index: 9, kind: input, shape index: {}]
  %s10 = inlined_call_operand.vmem [shape: bf16[4,32], index: 10, kind: input, shape index: {}]
  %s11 = inlined_call_operand.hbm [shape: f32[2,8,32], index: 11, kind: output, shape index: {}]
  %s12 = sld [smem:[#allocation0]]
  $region97: #{tpu_custom_call.1} parent=0
    _
  %s14 = ssub.s32 1, %s12
  %s15 = scalar_select 0, %s14, %s12
  $region1: #{tpu_custom_call.1} parent=0
    #allocation2 [shape = 'u8[4096]{0}', space=vmem, size = 0x1000, scoped, tag = 'input window, operand 1']
    #allocation3 [shape = 's32[2]{0}', space=sflag, size = 0x8, scoped, tag = 'scoped memory for tpu_custom_call.1']
    #allocation4 [shape = 's32[2]{0}', space=sflag, size = 0x8, scoped, tag = 'scoped memory for tpu_custom_call.1']
    #allocation5 [shape = 'u8[4096]{0}', space=vmem, size = 0x1000, scoped, tag = 'input window, operand 2']
    #allocation6 [shape = 's32[2]{0}', space=sflag, size = 0x8, scoped, tag = 'scoped memory for tpu_custom_call.1']
    #allocation7 [shape = 'u8[512]{0}', space=vmem, size = 0x400, scoped, tag = 'input window, operand 4, single buffered']
    #allocation8 [shape = 'u8[8192]{0}', space=vmem, size = 0x2000, scoped, tag = 'input window, operand 5, single buffered']
    #allocation9 [shape = 's32[1]{0}', space=sflag, size = 0x4, scoped, tag = 'scoped memory for tpu_custom_call.1']
    #allocation10 [shape = 'u8[8192]{0}', space=vmem, size = 0x2000, scoped, tag = 'input window, operand 7, single buffered']
    #allocation11 [shape = 'u8[8192]{0}', space=vmem, size = 0x2000, scoped, tag = 'output window, operand 0']
    %16 = vsyncpa [#allocation3], 0
    %s17 = scalar_lea.sflag [#allocation3], 1
    %18 = vsyncpa %s17, 0
    %19 = vsyncpa [#allocation6], 0
    %s20 = scalar_lea.sflag [#allocation6], 1
    %21 = vsyncpa %s20, 0
    %22 = vsyncpa [#allocation9], 0
    %23 = vsyncpa [#allocation4], 0
    %s24 = scalar_lea.sflag [#allocation4], 1
    %25 = vsyncpa %s24, 0
    loop: start=0, step=1, limit=4
    $region2: #{tpu_custom_call.1} parent=1 // loop_pre_header
      _
    $region3: #{tpu_custom_call.1} parent=1 // loop_header
      %s27 = sphi 0, %s31
      %p28 = scmp.ge.s32.totalorder %s27, 4
      %s37 = sphi 0, %s39
      %s40 = sphi 0, %s37
      %s41 = sphi 0, %s40
      %s57 = sphi 0, %s41
      %s63 = sphi 0, %s65
      %s66 = sphi 0, %s63
      %s67 = sphi 0, %s66
      %s83 = sphi 0, %s67
      %s89 = sphi 0, %s91
      %s92 = sphi 0, %s89
      %s93 = sphi 0, %s92
      %s109 = sphi 0, %s93
      %s113 = sphi 0, %s113
      %s115 = sphi 0, %s113
      %s116 = sphi 0, %s115
      %s130 = sphi 0, %s116
      %s134 = sphi 0, %s134
      %s136 = sphi 0, %s134
      %s137 = sphi 0, %s136
      %s151 = sphi 0, %s137
      %s155 = sphi 0, %s155
      %s157 = sphi 0, %s155
      %s158 = sphi 0, %s157
      %s172 = sphi 0, %s158
      %s176 = sphi 0, %s176
      %s178 = sphi 0, %s176
      %s179 = sphi 0, %s178
      %s193 = sphi 0, %s179
      %s197 = sphi 0, %s197
      %s199 = sphi 0, %s197
      %s200 = sphi 0, %s199
      %s214 = sphi 0, %s200
      %s218 = sphi 0, %s218
      %s220 = sphi 0, %s218
      %s221 = sphi 0, %s220
      %s235 = sphi 0, %s221
      %s239 = sphi 0, %s239
      %s241 = sphi 0, %s239
      %s242 = sphi 0, %s241
      %s256 = sphi 0, %s242
      %s260 = sphi 0, %s260
      %s262 = sphi 0, %s260
      %s263 = sphi 0, %s262
      %s277 = sphi 0, %s263
      %s283 = sphi 0, %s285
      %s286 = sphi 0, %s283
      %s287 = sphi 0, %s286
      %s303 = sphi 0, %s287
    $region4: #{tpu_custom_call.1} parent=1 // loop_header_branch
      %30 = sbr.rel (%p28) target = $region8
    $region5: #{tpu_custom_call.1} parent=1 // loop_body
      %s32 = ssub.s32 %s27, 1
      %s33 = ssub.s32 %s27, 2
      %s34 = sadd.s32 %s27, 1
      %s35 = ssub.s32 %s27, %s34
      %p36 = scmp.eq.s32.totalorder %s35, 0
      %s38 = sadd.s32 %s37, 1
      %s39 = scalar_select %p36, %s37, %s38
      %p42 = pneg %p36
      %p43 = scmp.eq.s32.totalorder %s27, 1
      %p44 = por %p42, %p43
      %p45 = scmp.ne.s32.totalorder %s37, %s40
      %p46 = scmp.eq.s32.totalorder %s27, 0
      %p47 = por %p45, %p46
      %p48 = scmp.ne.s32.totalorder %s37, %s40
      %p49 = scmp.eq.s32.totalorder %s32, 1
      %p50 = por %p48, %p49
      %p51 = scmp.ne.s32.totalorder %s40, %s41
      %p52 = scmp.eq.s32.totalorder %s32, 0
      %p53 = por %p51, %p52
      %p54 = scmp.ne.s32.totalorder %s40, %s41
      %p55 = scmp.eq.s32.totalorder %s33, 1
      %p56 = por %p54, %p55
      %p58 = scmp.ne.s32.totalorder %s41, %s57
      %p59 = scmp.eq.s32.totalorder %s33, 0
      %p60 = por %p58, %p59
      %s61 = ssub.s32 %s27, %s34
      %p62 = scmp.eq.s32.totalorder %s61, 0
      %s64 = sadd.s32 %s63, 1
      %s65 = scalar_select %p62, %s63, %s64
      %p68 = pneg %p62
      %p69 = scmp.eq.s32.totalorder %s27, 1
      %p70 = por %p68, %p69
      %p71 = scmp.ne.s32.totalorder %s63, %s66
      %p72 = scmp.eq.s32.totalorder %s27, 0
      %p73 = por %p71, %p72
      %p74 = scmp.ne.s32.totalorder %s63, %s66
      %p75 = scmp.eq.s32.totalorder %s32, 1
      %p76 = por %p74, %p75
      %p77 = scmp.ne.s32.totalorder %s66, %s67
      %p78 = scmp.eq.s32.totalorder %s32, 0
      %p79 = por %p77, %p78
      %p80 = scmp.ne.s32.totalorder %s66, %s67
      %p81 = scmp.eq.s32.totalorder %s33, 1
      %p82 = por %p80, %p81
      %p84 = scmp.ne.s32.totalorder %s67, %s83
      %p85 = scmp.eq.s32.totalorder %s33, 0
      %p86 = por %p84, %p85
      %s87 = ssub.s32 %s27, %s34
      %p88 = scmp.eq.s32.totalorder %s87, 0
      %s90 = sadd.s32 %s89, 1
      %s91 = scalar_select %p88, %s89, %s90
      %p94 = pneg %p88
      %p95 = scmp.eq.s32.totalorder %s27, 1
      %p96 = por %p94, %p95
      %p97 = scmp.ne.s32.totalorder %s89, %s92
      %p98 = scmp.eq.s32.totalorder %s27, 0
      %p99 = por %p97, %p98
      %p100 = scmp.ne.s32.totalorder %s89, %s92
      %p101 = scmp.eq.s32.totalorder %s32, 1
      %p102 = por %p100, %p101
      %p103 = scmp.ne.s32.totalorder %s92, %s93
      %p104 = scmp.eq.s32.totalorder %s32, 0
      %p105 = por %p103, %p104
      %p106 = scmp.ne.s32.totalorder %s92, %s93
      %p107 = scmp.eq.s32.totalorder %s33, 1
      %p108 = por %p106, %p107
      %p110 = scmp.ne.s32.totalorder %s93, %s109
      %p111 = scmp.eq.s32.totalorder %s33, 0
      %p112 = por %p110, %p111
      %s114 = sadd.s32 %s113, 1
      %p117 = scmp.eq.s32.totalorder %s27, 1
      %p118 = scmp.ne.s32.totalorder %s113, %s115
      %p119 = scmp.eq.s32.totalorder %s27, 0
      %p120 = por %p118, %p119
      %p121 = scmp.ne.s32.totalorder %s113, %s115
      %p122 = scmp.eq.s32.totalorder %s32, 1
      %p123 = por %p121, %p122
      %p124 = scmp.ne.s32.totalorder %s115, %s116
      %p125 = scmp.eq.s32.totalorder %s32, 0
      %p126 = por %p124, %p125
      %p127 = scmp.ne.s32.totalorder %s115, %s116
      %p128 = scmp.eq.s32.totalorder %s33, 1
      %p129 = por %p127, %p128
      %p131 = scmp.ne.s32.totalorder %s116, %s130
      %p132 = scmp.eq.s32.totalorder %s33, 0
      %p133 = por %p131, %p132
      %s135 = sadd.s32 %s134, 1
      %p138 = scmp.eq.s32.totalorder %s27, 1
      %p139 = scmp.ne.s32.totalorder %s134, %s136
      %p140 = scmp.eq.s32.totalorder %s27, 0
      %p141 = por %p139, %p140
      %p142 = scmp.ne.s32.totalorder %s134, %s136
      %p143 = scmp.eq.s32.totalorder %s32, 1
      %p144 = por %p142, %p143
      %p145 = scmp.ne.s32.totalorder %s136, %s137
      %p146 = scmp.eq.s32.totalorder %s32, 0
      %p147 = por %p145, %p146
      %p148 = scmp.ne.s32.totalorder %s136, %s137
      %p149 = scmp.eq.s32.totalorder %s33, 1
      %p150 = por %p148, %p149
      %p152 = scmp.ne.s32.totalorder %s137, %s151
      %p153 = scmp.eq.s32.totalorder %s33, 0
      %p154 = por %p152, %p153
      %s156 = sadd.s32 %s155, 1
      %p159 = scmp.eq.s32.totalorder %s27, 1
      %p160 = scmp.ne.s32.totalorder %s155, %s157
      %p161 = scmp.eq.s32.totalorder %s27, 0
      %p162 = por %p160, %p161
      %p163 = scmp.ne.s32.totalorder %s155, %s157
      %p164 = scmp.eq.s32.totalorder %s32, 1
      %p165 = por %p163, %p164
      %p166 = scmp.ne.s32.totalorder %s157, %s158
      %p167 = scmp.eq.s32.totalorder %s32, 0
      %p168 = por %p166, %p167
      %p169 = scmp.ne.s32.totalorder %s157, %s158
      %p170 = scmp.eq.s32.totalorder %s33, 1
      %p171 = por %p169, %p170
      %p173 = scmp.ne.s32.totalorder %s158, %s172
      %p174 = scmp.eq.s32.totalorder %s33, 0
      %p175 = por %p173, %p174
      %s177 = sadd.s32 %s176, 1
      %p180 = scmp.eq.s32.totalorder %s27, 1
      %p181 = scmp.ne.s32.totalorder %s176, %s178
      %p182 = scmp.eq.s32.totalorder %s27, 0
      %p183 = por %p181, %p182
      %p184 = scmp.ne.s32.totalorder %s176, %s178
      %p185 = scmp.eq.s32.totalorder %s32, 1
      %p186 = por %p184, %p185
      %p187 = scmp.ne.s32.totalorder %s178, %s179
      %p188 = scmp.eq.s32.totalorder %s32, 0
      %p189 = por %p187, %p188
      %p190 = scmp.ne.s32.totalorder %s178, %s179
      %p191 = scmp.eq.s32.totalorder %s33, 1
      %p192 = por %p190, %p191
      %p194 = scmp.ne.s32.totalorder %s179, %s193
      %p195 = scmp.eq.s32.totalorder %s33, 0
      %p196 = por %p194, %p195
      %s198 = sadd.s32 %s197, 1
      %p201 = scmp.eq.s32.totalorder %s27, 1
      %p202 = scmp.ne.s32.totalorder %s197, %s199
      %p203 = scmp.eq.s32.totalorder %s27, 0
      %p204 = por %p202, %p203
      %p205 = scmp.ne.s32.totalorder %s197, %s199
      %p206 = scmp.eq.s32.totalorder %s32, 1
      %p207 = por %p205, %p206
      %p208 = scmp.ne.s32.totalorder %s199, %s200
      %p209 = scmp.eq.s32.totalorder %s32, 0
      %p210 = por %p208, %p209
      %p211 = scmp.ne.s32.totalorder %s199, %s200
      %p212 = scmp.eq.s32.totalorder %s33, 1
      %p213 = por %p211, %p212
      %p215 = scmp.ne.s32.totalorder %s200, %s214
      %p216 = scmp.eq.s32.totalorder %s33, 0
      %p217 = por %p215, %p216
      %s219 = sadd.s32 %s218, 1
      %p222 = scmp.eq.s32.totalorder %s27, 1
      %p223 = scmp.ne.s32.totalorder %s218, %s220
      %p224 = scmp.eq.s32.totalorder %s27, 0
      %p225 = por %p223, %p224
      %p226 = scmp.ne.s32.totalorder %s218, %s220
      %p227 = scmp.eq.s32.totalorder %s32, 1
      %p228 = por %p226, %p227
      %p229 = scmp.ne.s32.totalorder %s220, %s221
      %p230 = scmp.eq.s32.totalorder %s32, 0
      %p231 = por %p229, %p230
      %p232 = scmp.ne.s32.totalorder %s220, %s221
      %p233 = scmp.eq.s32.totalorder %s33, 1
      %p234 = por %p232, %p233
      %p236 = scmp.ne.s32.totalorder %s221, %s235
      %p237 = scmp.eq.s32.totalorder %s33, 0
      %p238 = por %p236, %p237
      %s240 = sadd.s32 %s239, 1
      %p243 = scmp.eq.s32.totalorder %s27, 1
      %p244 = scmp.ne.s32.totalorder %s239, %s241
      %p245 = scmp.eq.s32.totalorder %s27, 0
      %p246 = por %p244, %p245
      %p247 = scmp.ne.s32.totalorder %s239, %s241
      %p248 = scmp.eq.s32.totalorder %s32, 1
      %p249 = por %p247, %p248
      %p250 = scmp.ne.s32.totalorder %s241, %s242
      %p251 = scmp.eq.s32.totalorder %s32, 0
      %p252 = por %p250, %p251
      %p253 = scmp.ne.s32.totalorder %s241, %s242
      %p254 = scmp.eq.s32.totalorder %s33, 1
      %p255 = por %p253, %p254
      %p257 = scmp.ne.s32.totalorder %s242, %s256
      %p258 = scmp.eq.s32.totalorder %s33, 0
      %p259 = por %p257, %p258
      %s261 = sadd.s32 %s260, 1
      %p264 = scmp.eq.s32.totalorder %s27, 1
      %p265 = scmp.ne.s32.totalorder %s260, %s262
      %p266 = scmp.eq.s32.totalorder %s27, 0
      %p267 = por %p265, %p266
      %p268 = scmp.ne.s32.totalorder %s260, %s262
      %p269 = scmp.eq.s32.totalorder %s32, 1
      %p270 = por %p268, %p269
      %p271 = scmp.ne.s32.totalorder %s262, %s263
      %p272 = scmp.eq.s32.totalorder %s32, 0
      %p273 = por %p271, %p272
      %p274 = scmp.ne.s32.totalorder %s262, %s263
      %p275 = scmp.eq.s32.totalorder %s33, 1
      %p276 = por %p274, %p275
      %p278 = scmp.ne.s32.totalorder %s263, %s277
      %p279 = scmp.eq.s32.totalorder %s33, 0
      %p280 = por %p278, %p279
      %s281 = ssub.s32 %s27, %s34
      %p282 = scmp.eq.s32.totalorder %s281, 0
      %s284 = sadd.s32 %s283, 1
      %s285 = scalar_select %p282, %s283, %s284
      %p288 = pneg %p282
      %p289 = scmp.eq.s32.totalorder %s27, 1
      %p290 = por %p288, %p289
      %p291 = scmp.ne.s32.totalorder %s283, %s286
      %p292 = scmp.eq.s32.totalorder %s27, 0
      %p293 = por %p291, %p292
      %p294 = scmp.ne.s32.totalorder %s283, %s286
      %p295 = scmp.eq.s32.totalorder %s32, 1
      %p296 = por %p294, %p295
      %p297 = scmp.ne.s32.totalorder %s286, %s287
      %p298 = scmp.eq.s32.totalorder %s32, 0
      %p299 = por %p297, %p298
      %p300 = scmp.ne.s32.totalorder %s286, %s287
      %p301 = scmp.eq.s32.totalorder %s33, 1
      %p302 = por %p300, %p301
      %p304 = scmp.ne.s32.totalorder %s287, %s303
      %p305 = scmp.eq.s32.totalorder %s33, 0
      %p306 = por %p304, %p305
      %p307 = scmp.le.s32.totalorder 1, %s27
      %p308 = scmp.lt.s32.totalorder %s27, 3
      %p309 = pnand %p307, %p308
      %p310 = pneg %p309
      // Predicated region
      $region9: #{tpu_custom_call.1} parent=5 // pred_check
        _
      $region10: #{tpu_custom_call.1} parent=5 // pred_check_branch
        %312 = sbr.rel (%p309) target = $region12
      $region11: #{tpu_custom_call.1} parent=5 // pred_region
        %s313 = ssub.s32 %s27, 1
        // Predicated region
        $region13: #{tpu_custom_call.1} parent=11 // pred_check
          %p314 = pneg %p126
        $region14: #{tpu_custom_call.1} parent=11 // pred_check_branch
          %316 = sbr.rel (%p314) target = $region16
        $region15: #{tpu_custom_call.1} parent=11 // pred_region
          _
        $region16: #{tpu_custom_call.1} parent=11 // pred_fallthru
          _
        // Predicated region
        $region17: #{tpu_custom_call.1} parent=11 // pred_check
          %p317 = pneg %p147
        $region18: #{tpu_custom_call.1} parent=11 // pred_check_branch
          %319 = sbr.rel (%p317) target = $region20
        $region19: #{tpu_custom_call.1} parent=11 // pred_region
          %321 = vsyncadd [#allocation6], 0
          %s323 = sshll.u32 %s4, 4
          %s324 = int_to_ptr.hbm [resolvable:$true] %s323
          %s325 = sshll.u32 [#allocation7], 4
          %s326 = int_to_ptr.vmem [resolvable:$true] %s325
          %328 = dma.hbm_to_vmem [thread:$0]  %s324, 16, %s326, [#allocation6]
        $region20: #{tpu_custom_call.1} parent=11 // pred_fallthru
          _
        // Predicated region
        $region21: #{tpu_custom_call.1} parent=11 // pred_check
          %p329 = pneg %p168
        $region22: #{tpu_custom_call.1} parent=11 // pred_check_branch
          %331 = sbr.rel (%p329) target = $region24
        $region23: #{tpu_custom_call.1} parent=11 // pred_region
          %333 = vsyncadd [#allocation9], 0
          %s334 = sshll.u32 %s5, 4
          %s335 = int_to_ptr.hbm [resolvable:$true] %s334
          %s336 = sshll.u32 [#allocation8], 4
          %s337 = int_to_ptr.vmem [resolvable:$true] %s336
          %342 = dma.hbm_to_vmem [thread:$0]  %s335, 256, %s337, [#allocation9], 64, 64, 4
        $region24: #{tpu_custom_call.1} parent=11 // pred_fallthru
          _
        // Predicated region
        $region25: #{tpu_custom_call.1} parent=11 // pred_check
          %p343 = pneg %p189
        $region26: #{tpu_custom_call.1} parent=11 // pred_check_branch
          %345 = sbr.rel (%p343) target = $region28
        $region27: #{tpu_custom_call.1} parent=11 // pred_region
          _
        $region28: #{tpu_custom_call.1} parent=11 // pred_fallthru
          _
        // Predicated region
        $region29: #{tpu_custom_call.1} parent=11 // pred_check
          %p346 = pneg %p210
        $region30: #{tpu_custom_call.1} parent=11 // pred_check_branch
          %348 = sbr.rel (%p346) target = $region32
        $region31: #{tpu_custom_call.1} parent=11 // pred_region
          %350 = vsyncadd [#allocation9], 0
          %s351 = sshll.u32 %s7, 4
          %s352 = int_to_ptr.hbm [resolvable:$true] %s351
          %s353 = sshll.u32 [#allocation10], 4
          %s354 = int_to_ptr.vmem [resolvable:$true] %s353
          %359 = dma.hbm_to_vmem [thread:$0]  %s352, 256, %s354, [#allocation9], 64, 64, 4
        $region32: #{tpu_custom_call.1} parent=11 // pred_fallthru
          _
        // Predicated region
        $region33: #{tpu_custom_call.1} parent=11 // pred_check
          %p360 = pneg %p231
        $region34: #{tpu_custom_call.1} parent=11 // pred_check_branch
          %362 = sbr.rel (%p360) target = $region36
        $region35: #{tpu_custom_call.1} parent=11 // pred_region
          _
        $region36: #{tpu_custom_call.1} parent=11 // pred_fallthru
          _
        // Predicated region
        $region37: #{tpu_custom_call.1} parent=11 // pred_check
          %p363 = pneg %p252
        $region38: #{tpu_custom_call.1} parent=11 // pred_check_branch
          %365 = sbr.rel (%p363) target = $region40
        $region39: #{tpu_custom_call.1} parent=11 // pred_region
          _
        $region40: #{tpu_custom_call.1} parent=11 // pred_fallthru
          _
        // Predicated region
        $region41: #{tpu_custom_call.1} parent=11 // pred_check
          %p366 = pneg %p273
        $region42: #{tpu_custom_call.1} parent=11 // pred_check_branch
          %368 = sbr.rel (%p366) target = $region44
        $region43: #{tpu_custom_call.1} parent=11 // pred_region
          _
        $region44: #{tpu_custom_call.1} parent=11 // pred_fallthru
          _
      $region12: #{tpu_custom_call.1} parent=5 // pred_fallthru
        _
      %p369 = scmp.lt.s32.totalorder %s27, 2
      // Predicated region
      $region45: #{tpu_custom_call.1} parent=5 // pred_check
        %p370 = pneg %p369
      $region46: #{tpu_custom_call.1} parent=5 // pred_check_branch
        %372 = sbr.rel (%p370) target = $region48
      $region47: #{tpu_custom_call.1} parent=5 // pred_region
        // Predicated region
        $region49: #{tpu_custom_call.1} parent=47 // pred_check
          %p373 = pneg %p47
        $region50: #{tpu_custom_call.1} parent=47 // pred_check_branch
          %375 = sbr.rel (%p373) target = $region52
        $region51: #{tpu_custom_call.1} parent=47 // pred_region
          %p376 = scmp.lt.s32.totalorder %s27, 1
          %s377 = scalar_select %p376, %s27, 1
          %s378 = scalar_lea.vmem %s0, %s377
        $region52: #{tpu_custom_call.1} parent=47 // pred_fallthru
          _
        // Predicated region
        $region53: #{tpu_custom_call.1} parent=47 // pred_check
          %p379 = pneg %p73
        $region54: #{tpu_custom_call.1} parent=47 // pred_check_branch
          %381 = sbr.rel (%p379) target = $region56
        $region55: #{tpu_custom_call.1} parent=47 // pred_region
          %s382 = sand.u32 %s63, 1
          %s383 = scalar_lea.sflag [#allocation3], %s382
          %s384 = sand.u32 %s63, 1
          %s385 = smul.addr %s384, 4
          %s386 = scalar_lea.vmem [#allocation2], %s385
          %388 = vsyncadd %s383, 0
          %s389 = smul.addr %s27, 4
          %s390 = scalar_lea.hbm %s1, %s389
          %s392 = sshll.u32 %s390, 4
          %s393 = int_to_ptr.hbm [resolvable:$true] %s392
          %s394 = sshll.u32 %s386, 4
          %s395 = int_to_ptr.vmem [resolvable:$true] %s394
          %397 = dma.hbm_to_vmem [thread:$0]  %s393, 64, %s395, %s383
        $region56: #{tpu_custom_call.1} parent=47 // pred_fallthru
          _
        // Predicated region
        $region57: #{tpu_custom_call.1} parent=47 // pred_check
          %p398 = pneg %p99
        $region58: #{tpu_custom_call.1} parent=47 // pred_check_branch
          %400 = sbr.rel (%p398) target = $region60
        $region59: #{tpu_custom_call.1} parent=47 // pred_region
          %s401 = sand.u32 %s27, 1
          %s402 = scalar_lea.sflag [#allocation6], %s401
          %s403 = sand.u32 %s89, 1
          %s404 = smul.addr %s403, 4
          %s405 = scalar_lea.vmem [#allocation5], %s404
          %407 = vsyncadd %s402, 0
          %s408 = smul.addr %s27, 4
          %s409 = scalar_lea.hbm %s2, %s408
          %s411 = sshll.u32 %s409, 4
          %s412 = int_to_ptr.hbm [resolvable:$true] %s411
          %s413 = sshll.u32 %s405, 4
          %s414 = int_to_ptr.vmem [resolvable:$true] %s413
          %416 = dma.hbm_to_vmem [thread:$0]  %s412, 64, %s414, %s402
        $region60: #{tpu_custom_call.1} parent=47 // pred_fallthru
          _
      $region48: #{tpu_custom_call.1} parent=5 // pred_fallthru
        _
      %p417 = scmp.le.s32.totalorder 1, %s27
      %p418 = scmp.lt.s32.totalorder %s27, 3
      %p419 = pnand %p417, %p418
      %p420 = pneg %p419
      // Predicated region
      $region61: #{tpu_custom_call.1} parent=5 // pred_check
        _
      $region62: #{tpu_custom_call.1} parent=5 // pred_check_branch
        %422 = sbr.rel (%p419) target = $region64
      $region63: #{tpu_custom_call.1} parent=5 // pred_region
        %s423 = ssub.s32 %s27, 1
        %s424 = sand.u32 %s66, 1
        %s425 = scalar_lea.sflag [#allocation3], %s424
        %s426 = sand.u32 %s66, 1
        %s427 = smul.addr %s426, 4
        %s428 = scalar_lea.vmem [#allocation2], %s427
        // Predicated region
        $region65: #{tpu_custom_call.1} parent=63 // pred_check
          %p429 = pneg %p79
        $region66: #{tpu_custom_call.1} parent=63 // pred_check_branch
          %431 = sbr.rel (%p429) target = $region68
        $region67: #{tpu_custom_call.1} parent=63 // pred_region
          %433 = dma.done %s425, 64
        $region68: #{tpu_custom_call.1} parent=63 // pred_fallthru
          _
        %s434 = sand.u32 %s32, 1
        %s435 = scalar_lea.sflag [#allocation6], %s434
        %s436 = sand.u32 %s92, 1
        %s437 = smul.addr %s436, 4
        %s438 = scalar_lea.vmem [#allocation5], %s437
        // Predicated region
        $region69: #{tpu_custom_call.1} parent=63 // pred_check
          %p439 = pneg %p105
        $region70: #{tpu_custom_call.1} parent=63 // pred_check_branch
          %441 = sbr.rel (%p439) target = $region72
        $region71: #{tpu_custom_call.1} parent=63 // pred_region
          %443 = dma.done %s435, 64
        $region72: #{tpu_custom_call.1} parent=63 // pred_fallthru
          _
        // Predicated region
        $region73: #{tpu_custom_call.1} parent=63 // pred_check
          %p444 = pneg %p147
        $region74: #{tpu_custom_call.1} parent=63 // pred_check_branch
          %446 = sbr.rel (%p444) target = $region76
        $region75: #{tpu_custom_call.1} parent=63 // pred_region
          %448 = dma.done [#allocation6], 16
        $region76: #{tpu_custom_call.1} parent=63 // pred_fallthru
          _
        // Predicated region
        $region77: #{tpu_custom_call.1} parent=63 // pred_check
          %p449 = pneg %p168
        $region78: #{tpu_custom_call.1} parent=63 // pred_check_branch
          %451 = sbr.rel (%p449) target = $region80
        $region79: #{tpu_custom_call.1} parent=63 // pred_region
          %453 = dma.done [#allocation9], 256
        $region80: #{tpu_custom_call.1} parent=63 // pred_fallthru
          _
        // Predicated region
        $region81: #{tpu_custom_call.1} parent=63 // pred_check
          %p454 = pneg %p210
        $region82: #{tpu_custom_call.1} parent=63 // pred_check_branch
          %456 = sbr.rel (%p454) target = $region84
        $region83: #{tpu_custom_call.1} parent=63 // pred_region
          %458 = dma.done [#allocation9], 256
        $region84: #{tpu_custom_call.1} parent=63 // pred_fallthru
          _
        %p459 = scmp.lt.s32.totalorder %s32, 1
        %s460 = scalar_select %p459, %s32, 1
        %s461 = scalar_lea.vmem %s0, %s460
        %p462 = pneg %p53
        %p463 = pneg %p50
        %s464 = sand.u32 %s66, 1
        %s465 = scalar_lea.sflag [#allocation3], %s464
        %s466 = sand.u32 %s66, 1
        %s467 = smul.addr %s466, 4
        %s468 = scalar_lea.vmem [#allocation2], %s467
        %p469 = pneg %p79
        %p470 = pneg %p76
        %s471 = sand.u32 %s32, 1
        %s472 = scalar_lea.sflag [#allocation6], %s471
        %s473 = sand.u32 %s92, 1
        %s474 = smul.addr %s473, 4
        %s475 = scalar_lea.vmem [#allocation5], %s474
        %p476 = pneg %p105
        %p477 = pneg %p102
        %p478 = pneg %p126
        %p479 = pneg %p123
        %p480 = pneg %p147
        %p481 = pneg %p144
        %p482 = pneg %p168
        %p483 = pneg %p165
        %p484 = pneg %p189
        %p485 = pneg %p186
        %p486 = pneg %p210
        %p487 = pneg %p207
        %p488 = pneg %p231
        %p489 = pneg %p228
        %p490 = pneg %p252
        %p491 = pneg %p249
        %p492 = pneg %p273
        %p493 = pneg %p270
        %p494 = pneg %p299
        %p495 = pneg %p296
        %s496 = sand.u32 %s286, 1
        %s497 = scalar_lea.sflag [#allocation4], %s496
        %s498 = sand.u32 %s286, 1
        %s499 = smul.addr %s498, 8
        %s500 = scalar_lea.vmem [#allocation11], %s499
        %p501 = scmp.lt.s32.totalorder %s32, 1
        %s502 = scalar_select %p501, %s32, 1
        %s503 = scalar_lea.vmem %s0, %s502
        %v505 = vld [vmem:[%s428] sm:$0xf]
        %v506 = vld [vmem:[%s438] sm:$0xf]
        %v507 = vld [vmem:[%s3] sm:$0xf]
        %v508 = vld [vmem:[%s3 + $0x4] sm:$0xf]
        %v509 = vld [vmem:[%s3 + $0x8] sm:$0xf]
        %v510 = vld [vmem:[%s3 + $0xc] sm:$0xf]
        %v511 = vld [vmem:[#allocation7] sm:$0x1]
        %v513 = vperm.slane %v511, 0
        %v519 = vunpack.c.l.b16 %v507
        %v520 = vunpack.c.l.b16 %v508
        %v521 = vunpack.c.l.b16 %v509
        %v522 = vunpack.c.l.b16 %v510
        %v523 = vpack.c.b16 %v520, %v519
        %v524 = vpack.c.b16 %v522, %v521
        %vm527 = vcmask 261120
        %v529 = vsel %vm527, %v505, 0
        %531 = vmatpush.bf16.msra.mxu0 0
        %532 = vmatpush.bf16.msra.mxu0 0
        %533 = vmatpush.bf16.msra.mxu0 0
        %534 = vmatpush.bf16.msra.mxu0 0
        %535 = vmatpush.bf16.msra.mxu0 0
        %536 = vmatpush.bf16.msra.mxu0 0
        %537 = vmatpush.bf16.msra.mxu0 %v524
        %538 = vmatpush.bf16.msra.mxu0 %v523
        %539 = vmatmul.bf16.gmra.mxu0 %v529
        %v540 = vpop.f32.mrf.mxu0
        %v541 = vadd.f32 %v513, %v540
        %v542 = vpop.f32.mrf.mxu0
        %543 = vdwg.mxu0
        %v544 = vld [vmem:[#allocation8] sm:$0xf]
        %v545 = vld [vmem:[#allocation8 + $0x4] sm:$0xf]
        %v546 = vld [vmem:[#allocation8 + $0x8] sm:$0xf]
        %v547 = vld [vmem:[#allocation8 + $0xc] sm:$0xf]
        %v548 = vld [vmem:[%s6] sm:$0x1]
        %v550 = vperm.slane %v548, 0
        %v556 = vunpack.c.l.b16 %v544
        %v557 = vunpack.c.l.b16 %v545
        %v558 = vunpack.c.l.b16 %v546
        %v559 = vunpack.c.l.b16 %v547
        %v560 = vpack.c.b16 %v557, %v556
        %v561 = vpack.c.b16 %v559, %v558
        %v565 = vsel %vm527, %v506, 0
        %567 = vmatpush.bf16.msra.mxu0 0
        %568 = vmatpush.bf16.msra.mxu0 0
        %569 = vmatpush.bf16.msra.mxu0 0
        %570 = vmatpush.bf16.msra.mxu0 0
        %571 = vmatpush.bf16.msra.mxu0 0
        %572 = vmatpush.bf16.msra.mxu0 0
        %573 = vmatpush.bf16.msra.mxu0 %v561
        %574 = vmatpush.bf16.msra.mxu0 %v560
        %575 = vmatmul.bf16.gmra.mxu0 %v565
        %v576 = vpop.f32.mrf.mxu0
        %v577 = vadd.f32 %v550, %v576
        %v578 = vpop.f32.mrf.mxu0
        %579 = vdwg.mxu0
        %v580 = vld [vmem:[%s503] sm:$0x1]
        %v582 = vperm.slane %v580, 0
        %v584 = vmul.f32 %v541, %v582
        %v585 = vpack.c.bf16 %v584, %v584
        %v586 = vld [vmem:[%s9] sm:$0xf]
        %v587 = vld [vmem:[%s9 + $0x4] sm:$0xf]
        %v588 = vld [vmem:[%s9 + $0x8] sm:$0xf]
        %v589 = vld [vmem:[%s9 + $0xc] sm:$0xf]
        %v594 = vunpack.c.l.b16 %v586
        %v595 = vunpack.c.l.b16 %v587
        %v596 = vunpack.c.l.b16 %v588
        %v597 = vunpack.c.l.b16 %v589
        %v598 = vpack.c.b16 %v595, %v594
        %v599 = vpack.c.b16 %v597, %v596
        %v603 = vsel %vm527, %v585, 0
        %605 = vmatpush.bf16.msra.mxu0 0
        %606 = vmatpush.bf16.msra.mxu0 0
        %607 = vmatpush.bf16.msra.mxu0 0
        %608 = vmatpush.bf16.msra.mxu0 0
        %609 = vmatpush.bf16.msra.mxu0 0
        %610 = vmatpush.bf16.msra.mxu0 0
        %611 = vmatpush.bf16.msra.mxu0 %v599
        %612 = vmatpush.bf16.msra.mxu0 %v598
        %613 = vmatmul.bf16.gmra.mxu0 %v603
        %v614 = vpop.f32.mrf.mxu0
        %v615 = vadd.f32 0.0, %v614
        %v616 = vpop.f32.mrf.mxu0
        %617 = vdwg.mxu0
        %vm618 = vcmask 31744
        %v619 = vsel %vm618, %v615, -inf
        %v620 = vrot.slane %v619, 4
        %v621 = vmax.f32 %v619, %v620
        %v622 = vrot.slane %v621, 2
        %v623 = vmax.f32 %v621, %v622
        %v624 = vrot.slane %v623, 1
        %v625 = vmax.f32 %v623, %v624
        %v626 = vsub.f32 %v615, %v625
        %v627 = vmul.f32 %v626, 1.442695
        %v628 = vpow.pop %v627
        %v629 = vsel %vm618, %v628, 0.0
        %v630 = vrot.slane %v629, 4
        %v631 = vadd.f32 %v629, %v630
        %v632 = vrot.slane %v631, 2
        %v633 = vadd.f32 %v631, %v632
        %v634 = vrot.slane %v633, 1
        %v635 = vadd.f32 %v633, %v634
        %v636 = vrcp.pop %v635
        %v637 = vmul.f32 %v628, %v636
        %v638 = vpack.c.bf16 %v637, %v637
        %v639 = vld [vmem:[%s10] sm:$0x3]
        %v641 = vsel %vm618, %v638, 0
        %vm643 = vcmask 1041408
        %v645 = vsel %vm643, %v639, 0
        %647 = vmatpush.bf16.msra.mxu0 0
        %648 = vmatpush.bf16.msra.mxu0 0
        %649 = vmatpush.bf16.msra.mxu0 0
        %650 = vmatpush.bf16.msra.mxu0 0
        %651 = vmatpush.bf16.msra.mxu0 0
        %652 = vmatpush.bf16.msra.mxu0 0
        %653 = vmatpush.bf16.msra.mxu0 0
        %654 = vmatpush.bf16.msra.mxu0 %v645
        %655 = vmatmul.bf16.gmra.mxu0 %v641
        %v656 = vpop.f32.mrf.mxu0
        %v657 = vadd.f32 0.0, %v656
        %v658 = vpop.f32.mrf.mxu0
        %659 = vdwg.mxu0
        %v660 = vmul.f32 %v657, %v577
        %v661 = vpack.c.bf16 %v660, %v660
        %v662 = vld [vmem:[#allocation10] sm:$0xf]
        %v663 = vld [vmem:[#allocation10 + $0x4] sm:$0xf]
        %v664 = vld [vmem:[#allocation10 + $0x8] sm:$0xf]
        %v665 = vld [vmem:[#allocation10 + $0xc] sm:$0xf]
        %v666 = vld [vmem:[%s8] sm:$0x1]
        %v668 = vperm.slane %v666, 0
        %v674 = vunpack.c.l.b16 %v662
        %v675 = vunpack.c.l.b16 %v663
        %v676 = vunpack.c.l.b16 %v664
        %v677 = vunpack.c.l.b16 %v665
        %v678 = vpack.c.b16 %v675, %v674
        %v679 = vpack.c.b16 %v677, %v676
        %v683 = vsel %vm527, %v661, 0
        %685 = vmatpush.bf16.msra.mxu0 0
        %686 = vmatpush.bf16.msra.mxu0 0
        %687 = vmatpush.bf16.msra.mxu0 0
        %688 = vmatpush.bf16.msra.mxu0 0
        %689 = vmatpush.bf16.msra.mxu0 0
        %690 = vmatpush.bf16.msra.mxu0 0
        %691 = vmatpush.bf16.msra.mxu0 %v679
        %692 = vmatpush.bf16.msra.mxu0 %v678
        %693 = vmatmul.bf16.gmra.mxu0 %v683
        %v694 = vpop.f32.mrf.mxu0
        %v695 = vadd.f32 %v668, %v694
        %v696 = vpop.f32.mrf.mxu0
        %697 = vdwg.mxu0
        %698 = vst.msk [vmem:[%s500] sm:$0xff] %vm527, %v695
        %s699 = sand.u32 %s286, 1
        %s700 = scalar_lea.sflag [#allocation4], %s699
        %s701 = sand.u32 %s286, 1
        %s702 = smul.addr %s701, 8
        %s703 = scalar_lea.vmem [#allocation11], %s702
        // Predicated region
        $region85: #{tpu_custom_call.1} parent=63 // pred_check
          %p704 = pneg %p296
        $region86: #{tpu_custom_call.1} parent=63 // pred_check_branch
          %706 = sbr.rel (%p704) target = $region88
        $region87: #{tpu_custom_call.1} parent=63 // pred_region
          %708 = vsyncadd %s700, 0
          %s709 = smul.addr %s32, 8
          %s710 = scalar_lea.hbm %s11, %s709
          %s712 = sshll.u32 %s703, 4
          %s713 = int_to_ptr.vmem [resolvable:$true] %s712
          %s714 = sshll.u32 %s710, 4
          %s715 = int_to_ptr.hbm [resolvable:$true] %s714
          %717 = dma.vmem_to_hbm [thread:$0]  %s713, 128, %s715, %s700
        $region88: #{tpu_custom_call.1} parent=63 // pred_fallthru
          _
      $region64: #{tpu_custom_call.1} parent=5 // pred_fallthru
        _
      %p718 = scmp.le.s32.totalorder 2, %s27
      // Predicated region
      $region89: #{tpu_custom_call.1} parent=5 // pred_check
        %p719 = pneg %p718
      $region90: #{tpu_custom_call.1} parent=5 // pred_check_branch
        %721 = sbr.rel (%p719) target = $region92
      $region91: #{tpu_custom_call.1} parent=5 // pred_region
        %s722 = ssub.s32 %s27, 2
        // Predicated region
        $region93: #{tpu_custom_call.1} parent=91 // pred_check
          %p723 = pneg %p302
        $region94: #{tpu_custom_call.1} parent=91 // pred_check_branch
          %725 = sbr.rel (%p723) target = $region96
        $region95: #{tpu_custom_call.1} parent=91 // pred_region
          %s726 = sand.u32 %s287, 1
          %s727 = scalar_lea.sflag [#allocation4], %s726
          %s728 = sand.u32 %s287, 1
          %s729 = smul.addr %s728, 8
          %s730 = scalar_lea.vmem [#allocation11], %s729
          %732 = dma.done %s727, 128
        $region96: #{tpu_custom_call.1} parent=91 // pred_fallthru
          _
      $region92: #{tpu_custom_call.1} parent=5 // pred_fallthru
        _
    $region6: #{tpu_custom_call.1} parent=1 // loop_footer
      %s31 = sadd.s32 1, %s27
    $region7: #{tpu_custom_call.1} parent=1 // loop_footer_branch
      %26 = sbr.rel target = $region3
    $region8: #{tpu_custom_call.1} parent=1 // loop_exit
      _
    %733 = vsyncpa [#allocation3], 1
    %s734 = scalar_lea.sflag [#allocation3], 1
    %735 = vsyncpa %s734, 1
    %736 = vsyncpa [#allocation6], 1
    %s737 = scalar_lea.sflag [#allocation6], 1
    %738 = vsyncpa %s737, 1
    %739 = vsyncpa [#allocation9], 1
    %740 = vsyncpa [#allocation4], 1
    %s741 = scalar_lea.sflag [#allocation4], 1
    %742 = vsyncpa %s741, 1

// kernel: tpu_custom_call.1
$region0: #{tpu_custom_call.1}
  #allocation0 [shape = 'u32[]', space=smem, size = 0x4, offset = 0x4, fixed_abs, tag = 'smem constant byte address 0x4 - core index']
  #allocation1 [shape = 'u32[72,128]{1,0:T(1,128)}', space=vmem, size = 0x9000, scoped, tag = 'internal scratch']
  %s0 = inlined_call_operand.vmem [shape: f32[2,1,32], index: 0, kind: input, shape index: {}]
  %s1 = inlined_call_operand.hbm [shape: bf16[2,8,32], index: 1, kind: input, shape index: {}]
  %s2 = inlined_call_operand.hbm [shape: bf16[2,8,32], index: 2, kind: input, shape index: {}]
  %s3 = inlined_call_operand.vmem [shape: bf16[32,32], index: 3, kind: input, shape index: {}]
  %s4 = inlined_call_operand.hbm [shape: f32[1,32], index: 4, kind: input, shape index: {}]
  %s5 = inlined_call_operand.hbm [shape: bf16[32,32], index: 5, kind: input, shape index: {}]
  %s6 = inlined_call_operand.vmem [shape: f32[1,32], index: 6, kind: input, shape index: {}]
  %s7 = inlined_call_operand.hbm [shape: bf16[32,32], index: 7, kind: input, shape index: {}]
  %s8 = inlined_call_operand.vmem [shape: f32[1,32], index: 8, kind: input, shape index: {}]
  %s9 = inlined_call_operand.vmem [shape: bf16[32,4], index: 9, kind: input, shape index: {}]
  %s10 = inlined_call_operand.vmem [shape: bf16[4,32], index: 10, kind: input, shape index: {}]
  %s11 = inlined_call_operand.hbm [shape: f32[2,8,32], index: 11, kind: output, shape index: {}]
  %s12 = sld [smem:[#allocation0]]
  $region97: #{tpu_custom_call.1} parent=0
    _
  %s14 = ssub.s32 1, %s12
  %s15 = scalar_select 0, %s14, %s12
  $region1: #{tpu_custom_call.1} parent=0
    #allocation2 [shape = 'u8[4096]{0}', space=vmem, size = 0x1000, scoped, tag = 'input window, operand 1']
    #allocation3 [shape = 's32[2]{0}', space=sflag, size = 0x8, scoped, tag = 'scoped memory for tpu_custom_call.1']
    #allocation4 [shape = 's32[2]{0}', space=sflag, size = 0x8, scoped, tag = 'scoped memory for tpu_custom_call.1']
    #allocation5 [shape = 'u8[4096]{0}', space=vmem, size = 0x1000, scoped, tag = 'input window, operand 2']
    #allocation6 [shape = 's32[2]{0}', space=sflag, size = 0x8, scoped, tag = 'scoped memory for tpu_custom_call.1']
    #allocation7 [shape = 'u8[512]{0}', space=vmem, size = 0x400, scoped, tag = 'input window, operand 4, single buffered']
    #allocation8 [shape = 'u8[8192]{0}', space=vmem, size = 0x2000, scoped, tag = 'input window, operand 5, single buffered']
    #allocation9 [shape = 's32[1]{0}', space=sflag, size = 0x4, scoped, tag = 'scoped memory for tpu_custom_call.1']
    #allocation10 [shape = 'u8[8192]{0}', space=vmem, size = 0x2000, scoped, tag = 'input window, operand 7, single buffered']
    #allocation11 [shape = 'u8[8192]{0}', space=vmem, size = 0x2000, scoped, tag = 'output window, operand 0']
    %16 = vsyncpa [#allocation3], 0
    %s17 = scalar_lea.sflag [#allocation3], 1
    %18 = vsyncpa %s17, 0
    %19 = vsyncpa [#allocation6], 0
    %s20 = scalar_lea.sflag [#allocation6], 1
    %21 = vsyncpa %s20, 0
    %22 = vsyncpa [#allocation9], 0
    %23 = vsyncpa [#allocation4], 0
    %s24 = scalar_lea.sflag [#allocation4], 1
    %25 = vsyncpa %s24, 0
    loop: start=0, step=1, limit=4
    $region2: #{tpu_custom_call.1} parent=1 // loop_pre_header
      _
    $region3: #{tpu_custom_call.1} parent=1 // loop_header
      %s27 = sphi 0, %s31
      %p28 = scmp.ge.s32.totalorder %s27, 4
      %s37 = sphi 0, %s39
      %s40 = sphi 0, %s37
      %s41 = sphi 0, %s40
      %s57 = sphi 0, %s41
      %s63 = sphi 0, %s65
      %s66 = sphi 0, %s63
      %s67 = sphi 0, %s66
      %s83 = sphi 0, %s67
      %s89 = sphi 0, %s91
      %s92 = sphi 0, %s89
      %s93 = sphi 0, %s92
      %s109 = sphi 0, %s93
      %s113 = sphi 0, %s113
      %s115 = sphi 0, %s113
      %s116 = sphi 0, %s115
      %s130 = sphi 0, %s116
      %s134 = sphi 0, %s134
      %s136 = sphi 0, %s134
      %s137 = sphi 0, %s136
      %s151 = sphi 0, %s137
      %s155 = sphi 0, %s155
      %s157 = sphi 0, %s155
      %s158 = sphi 0, %s157
      %s172 = sphi 0, %s158
      %s176 = sphi 0, %s176
      %s178 = sphi 0, %s176
      %s179 = sphi 0, %s178
      %s193 = sphi 0, %s179
      %s197 = sphi 0, %s197
      %s199 = sphi 0, %s197
      %s200 = sphi 0, %s199
      %s214 = sphi 0, %s200
      %s218 = sphi 0, %s218
      %s220 = sphi 0, %s218
      %s221 = sphi 0, %s220
      %s235 = sphi 0, %s221
      %s239 = sphi 0, %s239
      %s241 = sphi 0, %s239
      %s242 = sphi 0, %s241
      %s256 = sphi 0, %s242
      %s260 = sphi 0, %s260
      %s262 = sphi 0, %s260
      %s263 = sphi 0, %s262
      %s277 = sphi 0, %s263
      %s283 = sphi 0, %s285
      %s286 = sphi 0, %s283
      %s287 = sphi 0, %s286
      %s303 = sphi 0, %s287
    $region4: #{tpu_custom_call.1} parent=1 // loop_header_branch
      %30 = sbr.rel (%p28) target = $region8
    $region5: #{tpu_custom_call.1} parent=1 // loop_body
      %s32 = ssub.s32 %s27, 1
      %s33 = ssub.s32 %s27, 2
      %s34 = sadd.s32 %s27, 1
      %s35 = ssub.s32 %s27, %s34
      %p36 = scmp.eq.s32.totalorder %s35, 0
      %s38 = sadd.s32 %s37, 1
      %s39 = scalar_select %p36, %s37, %s38
      %p42 = pneg %p36
      %p43 = scmp.eq.s32.totalorder %s27, 1
      %p44 = por %p42, %p43
      %p45 = scmp.ne.s32.totalorder %s37, %s40
      %p46 = scmp.eq.s32.totalorder %s27, 0
      %p47 = por %p45, %p46
      %p48 = scmp.ne.s32.totalorder %s37, %s40
      %p49 = scmp.eq.s32.totalorder %s32, 1
      %p50 = por %p48, %p49
      %p51 = scmp.ne.s32.totalorder %s40, %s41
      %p52 = scmp.eq.s32.totalorder %s32, 0
      %p53 = por %p51, %p52
      %p54 = scmp.ne.s32.totalorder %s40, %s41
      %p55 = scmp.eq.s32.totalorder %s33, 1
      %p56 = por %p54, %p55
      %p58 = scmp.ne.s32.totalorder %s41, %s57
      %p59 = scmp.eq.s32.totalorder %s33, 0
      %p60 = por %p58, %p59
      %s61 = ssub.s32 %s27, %s34
      %p62 = scmp.eq.s32.totalorder %s61, 0
      %s64 = sadd.s32 %s63, 1
      %s65 = scalar_select %p62, %s63, %s64
      %p68 = pneg %p62
      %p69 = scmp.eq.s32.totalorder %s27, 1
      %p70 = por %p68, %p69
      %p71 = scmp.ne.s32.totalorder %s63, %s66
      %p72 = scmp.eq.s32.totalorder %s27, 0
      %p73 = por %p71, %p72
      %p74 = scmp.ne.s32.totalorder %s63, %s66
      %p75 = scmp.eq.s32.totalorder %s32, 1
      %p76 = por %p74, %p75
      %p77 = scmp.ne.s32.totalorder %s66, %s67
      %p78 = scmp.eq.s32.totalorder %s32, 0
      %p79 = por %p77, %p78
      %p80 = scmp.ne.s32.totalorder %s66, %s67
      %p81 = scmp.eq.s32.totalorder %s33, 1
      %p82 = por %p80, %p81
      %p84 = scmp.ne.s32.totalorder %s67, %s83
      %p85 = scmp.eq.s32.totalorder %s33, 0
      %p86 = por %p84, %p85
      %s87 = ssub.s32 %s27, %s34
      %p88 = scmp.eq.s32.totalorder %s87, 0
      %s90 = sadd.s32 %s89, 1
      %s91 = scalar_select %p88, %s89, %s90
      %p94 = pneg %p88
      %p95 = scmp.eq.s32.totalorder %s27, 1
      %p96 = por %p94, %p95
      %p97 = scmp.ne.s32.totalorder %s89, %s92
      %p98 = scmp.eq.s32.totalorder %s27, 0
      %p99 = por %p97, %p98
      %p100 = scmp.ne.s32.totalorder %s89, %s92
      %p101 = scmp.eq.s32.totalorder %s32, 1
      %p102 = por %p100, %p101
      %p103 = scmp.ne.s32.totalorder %s92, %s93
      %p104 = scmp.eq.s32.totalorder %s32, 0
      %p105 = por %p103, %p104
      %p106 = scmp.ne.s32.totalorder %s92, %s93
      %p107 = scmp.eq.s32.totalorder %s33, 1
      %p108 = por %p106, %p107
      %p110 = scmp.ne.s32.totalorder %s93, %s109
      %p111 = scmp.eq.s32.totalorder %s33, 0
      %p112 = por %p110, %p111
      %s114 = sadd.s32 %s113, 1
      %p117 = scmp.eq.s32.totalorder %s27, 1
      %p118 = scmp.ne.s32.totalorder %s113, %s115
      %p119 = scmp.eq.s32.totalorder %s27, 0
      %p120 = por %p118, %p119
      %p121 = scmp.ne.s32.totalorder %s113, %s115
      %p122 = scmp.eq.s32.totalorder %s32, 1
      %p123 = por %p121, %p122
      %p124 = scmp.ne.s32.totalorder %s115, %s116
      %p125 = scmp.eq.s32.totalorder %s32, 0
      %p126 = por %p124, %p125
      %p127 = scmp.ne.s32.totalorder %s115, %s116
      %p128 = scmp.eq.s32.totalorder %s33, 1
      %p129 = por %p127, %p128
      %p131 = scmp.ne.s32.totalorder %s116, %s130
      %p132 = scmp.eq.s32.totalorder %s33, 0
      %p133 = por %p131, %p132
      %s135 = sadd.s32 %s134, 1
      %p138 = scmp.eq.s32.totalorder %s27, 1
      %p139 = scmp.ne.s32.totalorder %s134, %s136
      %p140 = scmp.eq.s32.totalorder %s27, 0
      %p141 = por %p139, %p140
      %p142 = scmp.ne.s32.totalorder %s134, %s136
      %p143 = scmp.eq.s32.totalorder %s32, 1
      %p144 = por %p142, %p143
      %p145 = scmp.ne.s32.totalorder %s136, %s137
      %p146 = scmp.eq.s32.totalorder %s32, 0
      %p147 = por %p145, %p146
      %p148 = scmp.ne.s32.totalorder %s136, %s137
      %p149 = scmp.eq.s32.totalorder %s33, 1
      %p150 = por %p148, %p149
      %p152 = scmp.ne.s32.totalorder %s137, %s151
      %p153 = scmp.eq.s32.totalorder %s33, 0
      %p154 = por %p152, %p153
      %s156 = sadd.s32 %s155, 1
      %p159 = scmp.eq.s32.totalorder %s27, 1
      %p160 = scmp.ne.s32.totalorder %s155, %s157
      %p161 = scmp.eq.s32.totalorder %s27, 0
      %p162 = por %p160, %p161
      %p163 = scmp.ne.s32.totalorder %s155, %s157
      %p164 = scmp.eq.s32.totalorder %s32, 1
      %p165 = por %p163, %p164
      %p166 = scmp.ne.s32.totalorder %s157, %s158
      %p167 = scmp.eq.s32.totalorder %s32, 0
      %p168 = por %p166, %p167
      %p169 = scmp.ne.s32.totalorder %s157, %s158
      %p170 = scmp.eq.s32.totalorder %s33, 1
      %p171 = por %p169, %p170
      %p173 = scmp.ne.s32.totalorder %s158, %s172
      %p174 = scmp.eq.s32.totalorder %s33, 0
      %p175 = por %p173, %p174
      %s177 = sadd.s32 %s176, 1
      %p180 = scmp.eq.s32.totalorder %s27, 1
      %p181 = scmp.ne.s32.totalorder %s176, %s178
      %p182 = scmp.eq.s32.totalorder %s27, 0
      %p183 = por %p181, %p182
      %p184 = scmp.ne.s32.totalorder %s176, %s178
      %p185 = scmp.eq.s32.totalorder %s32, 1
      %p186 = por %p184, %p185
      %p187 = scmp.ne.s32.totalorder %s178, %s179
      %p188 = scmp.eq.s32.totalorder %s32, 0
      %p189 = por %p187, %p188
      %p190 = scmp.ne.s32.totalorder %s178, %s179
      %p191 = scmp.eq.s32.totalorder %s33, 1
      %p192 = por %p190, %p191
      %p194 = scmp.ne.s32.totalorder %s179, %s193
      %p195 = scmp.eq.s32.totalorder %s33, 0
      %p196 = por %p194, %p195
      %s198 = sadd.s32 %s197, 1
      %p201 = scmp.eq.s32.totalorder %s27, 1
      %p202 = scmp.ne.s32.totalorder %s197, %s199
      %p203 = scmp.eq.s32.totalorder %s27, 0
      %p204 = por %p202, %p203
      %p205 = scmp.ne.s32.totalorder %s197, %s199
      %p206 = scmp.eq.s32.totalorder %s32, 1
      %p207 = por %p205, %p206
      %p208 = scmp.ne.s32.totalorder %s199, %s200
      %p209 = scmp.eq.s32.totalorder %s32, 0
      %p210 = por %p208, %p209
      %p211 = scmp.ne.s32.totalorder %s199, %s200
      %p212 = scmp.eq.s32.totalorder %s33, 1
      %p213 = por %p211, %p212
      %p215 = scmp.ne.s32.totalorder %s200, %s214
      %p216 = scmp.eq.s32.totalorder %s33, 0
      %p217 = por %p215, %p216
      %s219 = sadd.s32 %s218, 1
      %p222 = scmp.eq.s32.totalorder %s27, 1
      %p223 = scmp.ne.s32.totalorder %s218, %s220
      %p224 = scmp.eq.s32.totalorder %s27, 0
      %p225 = por %p223, %p224
      %p226 = scmp.ne.s32.totalorder %s218, %s220
      %p227 = scmp.eq.s32.totalorder %s32, 1
      %p228 = por %p226, %p227
      %p229 = scmp.ne.s32.totalorder %s220, %s221
      %p230 = scmp.eq.s32.totalorder %s32, 0
      %p231 = por %p229, %p230
      %p232 = scmp.ne.s32.totalorder %s220, %s221
      %p233 = scmp.eq.s32.totalorder %s33, 1
      %p234 = por %p232, %p233
      %p236 = scmp.ne.s32.totalorder %s221, %s235
      %p237 = scmp.eq.s32.totalorder %s33, 0
      %p238 = por %p236, %p237
      %s240 = sadd.s32 %s239, 1
      %p243 = scmp.eq.s32.totalorder %s27, 1
      %p244 = scmp.ne.s32.totalorder %s239, %s241
      %p245 = scmp.eq.s32.totalorder %s27, 0
      %p246 = por %p244, %p245
      %p247 = scmp.ne.s32.totalorder %s239, %s241
      %p248 = scmp.eq.s32.totalorder %s32, 1
      %p249 = por %p247, %p248
      %p250 = scmp.ne.s32.totalorder %s241, %s242
      %p251 = scmp.eq.s32.totalorder %s32, 0
      %p252 = por %p250, %p251
      %p253 = scmp.ne.s32.totalorder %s241, %s242
      %p254 = scmp.eq.s32.totalorder %s33, 1
      %p255 = por %p253, %p254
      %p257 = scmp.ne.s32.totalorder %s242, %s256
      %p258 = scmp.eq.s32.totalorder %s33, 0
      %p259 = por %p257, %p258
      %s261 = sadd.s32 %s260, 1
      %p264 = scmp.eq.s32.totalorder %s27, 1
      %p265 = scmp.ne.s32.totalorder %s260, %s262
      %p266 = scmp.eq.s32.totalorder %s27, 0
      %p267 = por %p265, %p266
      %p268 = scmp.ne.s32.totalorder %s260, %s262
      %p269 = scmp.eq.s32.totalorder %s32, 1
      %p270 = por %p268, %p269
      %p271 = scmp.ne.s32.totalorder %s262, %s263
      %p272 = scmp.eq.s32.totalorder %s32, 0
      %p273 = por %p271, %p272
      %p274 = scmp.ne.s32.totalorder %s262, %s263
      %p275 = scmp.eq.s32.totalorder %s33, 1
      %p276 = por %p274, %p275
      %p278 = scmp.ne.s32.totalorder %s263, %s277
      %p279 = scmp.eq.s32.totalorder %s33, 0
      %p280 = por %p278, %p279
      %s281 = ssub.s32 %s27, %s34
      %p282 = scmp.eq.s32.totalorder %s281, 0
      %s284 = sadd.s32 %s283, 1
      %s285 = scalar_select %p282, %s283, %s284
      %p288 = pneg %p282
      %p289 = scmp.eq.s32.totalorder %s27, 1
      %p290 = por %p288, %p289
      %p291 = scmp.ne.s32.totalorder %s283, %s286
      %p292 = scmp.eq.s32.totalorder %s27, 0
      %p293 = por %p291, %p292
      %p294 = scmp.ne.s32.totalorder %s283, %s286
      %p295 = scmp.eq.s32.totalorder %s32, 1
      %p296 = por %p294, %p295
      %p297 = scmp.ne.s32.totalorder %s286, %s287
      %p298 = scmp.eq.s32.totalorder %s32, 0
      %p299 = por %p297, %p298
      %p300 = scmp.ne.s32.totalorder %s286, %s287
      %p301 = scmp.eq.s32.totalorder %s33, 1
      %p302 = por %p300, %p301
      %p304 = scmp.ne.s32.totalorder %s287, %s303
      %p305 = scmp.eq.s32.totalorder %s33, 0
      %p306 = por %p304, %p305
      %p307 = scmp.le.s32.totalorder 1, %s27
      %p308 = scmp.lt.s32.totalorder %s27, 3
      %p309 = pnand %p307, %p308
      %p310 = pneg %p309
      // Predicated region
      $region9: #{tpu_custom_call.1} parent=5 // pred_check
        _
      $region10: #{tpu_custom_call.1} parent=5 // pred_check_branch
        %312 = sbr.rel (%p309) target = $region12
      $region11: #{tpu_custom_call.1} parent=5 // pred_region
        %s313 = ssub.s32 %s27, 1
        // Predicated region
        $region13: #{tpu_custom_call.1} parent=11 // pred_check
          %p314 = pneg %p126
        $region14: #{tpu_custom_call.1} parent=11 // pred_check_branch
          %316 = sbr.rel (%p314) target = $region16
        $region15: #{tpu_custom_call.1} parent=11 // pred_region
          _
        $region16: #{tpu_custom_call.1} parent=11 // pred_fallthru
          _
        // Predicated region
        $region17: #{tpu_custom_call.1} parent=11 // pred_check
          %p317 = pneg %p147
        $region18: #{tpu_custom_call.1} parent=11 // pred_check_branch
          %319 = sbr.rel (%p317) target = $region20
        $region19: #{tpu_custom_call.1} parent=11 // pred_region
          %321 = vsyncadd [#allocation6], 0
          %s323 = sshll.u32 %s4, 4
          %s324 = int_to_ptr.hbm [resolvable:$true] %s323
          %s325 = sshll.u32 [#allocation7], 4
          %s326 = int_to_ptr.vmem [resolvable:$true] %s325
          %328 = dma.hbm_to_vmem [thread:$0]  %s324, 16, %s326, [#allocation6]
        $region20: #{tpu_custom_call.1} parent=11 // pred_fallthru
          _
        // Predicated region
        $region21: #{tpu_custom_call.1} parent=11 // pred_check
          %p329 = pneg %p168
        $region22: #{tpu_custom_call.1} parent=11 // pred_check_branch
          %331 = sbr.rel (%p329) target = $region24
        $region23: #{tpu_custom_call.1} parent=11 // pred_region
          %333 = vsyncadd [#allocation9], 0
          %s334 = sshll.u32 %s5, 4
          %s335 = int_to_ptr.hbm [resolvable:$true] %s334
          %s336 = sshll.u32 [#allocation8], 4
          %s337 = int_to_ptr.vmem [resolvable:$true] %s336
          %342 = dma.hbm_to_vmem [thread:$0]  %s335, 256, %s337, [#allocation9], 64, 64, 4
        $region24: #{tpu_custom_call.1} parent=11 // pred_fallthru
          _
        // Predicated region
        $region25: #{tpu_custom_call.1} parent=11 // pred_check
          %p343 = pneg %p189
        $region26: #{tpu_custom_call.1} parent=11 // pred_check_branch
          %345 = sbr.rel (%p343) target = $region28
        $region27: #{tpu_custom_call.1} parent=11 // pred_region
          _
        $region28: #{tpu_custom_call.1} parent=11 // pred_fallthru
          _
        // Predicated region
        $region29: #{tpu_custom_call.1} parent=11 // pred_check
          %p346 = pneg %p210
        $region30: #{tpu_custom_call.1} parent=11 // pred_check_branch
          %348 = sbr.rel (%p346) target = $region32
        $region31: #{tpu_custom_call.1} parent=11 // pred_region
          %350 = vsyncadd [#allocation9], 0
          %s351 = sshll.u32 %s7, 4
          %s352 = int_to_ptr.hbm [resolvable:$true] %s351
          %s353 = sshll.u32 [#allocation10], 4
          %s354 = int_to_ptr.vmem [resolvable:$true] %s353
          %359 = dma.hbm_to_vmem [thread:$0]  %s352, 256, %s354, [#allocation9], 64, 64, 4
        $region32: #{tpu_custom_call.1} parent=11 // pred_fallthru
          _
        // Predicated region
        $region33: #{tpu_custom_call.1} parent=11 // pred_check
          %p360 = pneg %p231
        $region34: #{tpu_custom_call.1} parent=11 // pred_check_branch
          %362 = sbr.rel (%p360) target = $region36
        $region35: #{tpu_custom_call.1} parent=11 // pred_region
          _
        $region36: #{tpu_custom_call.1} parent=11 // pred_fallthru
          _
        // Predicated region
        $region37: #{tpu_custom_call.1} parent=11 // pred_check
          %p363 = pneg %p252
        $region38: #{tpu_custom_call.1} parent=11 // pred_check_branch
          %365 = sbr.rel (%p363) target = $region40
        $region39: #{tpu_custom_call.1} parent=11 // pred_region
          _
        $region40: #{tpu_custom_call.1} parent=11 // pred_fallthru
          _
        // Predicated region
        $region41: #{tpu_custom_call.1} parent=11 // pred_check
          %p366 = pneg %p273
        $region42: #{tpu_custom_call.1} parent=11 // pred_check_branch
          %368 = sbr.rel (%p366) target = $region44
        $region43: #{tpu_custom_call.1} parent=11 // pred_region
          _
        $region44: #{tpu_custom_call.1} parent=11 // pred_fallthru
          _
      $region12: #{tpu_custom_call.1} parent=5 // pred_fallthru
        _
      %p369 = scmp.lt.s32.totalorder %s27, 2
      // Predicated region
      $region45: #{tpu_custom_call.1} parent=5 // pred_check
        %p370 = pneg %p369
      $region46: #{tpu_custom_call.1} parent=5 // pred_check_branch
        %372 = sbr.rel (%p370) target = $region48
      $region47: #{tpu_custom_call.1} parent=5 // pred_region
        // Predicated region
        $region49: #{tpu_custom_call.1} parent=47 // pred_check
          %p373 = pneg %p47
        $region50: #{tpu_custom_call.1} parent=47 // pred_check_branch
          %375 = sbr.rel (%p373) target = $region52
        $region51: #{tpu_custom_call.1} parent=47 // pred_region
          %p376 = scmp.lt.s32.totalorder %s27, 1
          %s377 = scalar_select %p376, %s27, 1
          %s378 = scalar_lea.vmem %s0, %s377
        $region52: #{tpu_custom_call.1} parent=47 // pred_fallthru
          _
        // Predicated region
        $region53: #{tpu_custom_call.1} parent=47 // pred_check
          %p379 = pneg %p73
        $region54: #{tpu_custom_call.1} parent=47 // pred_check_branch
          %381 = sbr.rel (%p379) target = $region56
        $region55: #{tpu_custom_call.1} parent=47 // pred_region
          %s382 = sand.u32 %s63, 1
          %s383 = scalar_lea.sflag [#allocation3], %s382
          %s384 = sand.u32 %s63, 1
          %s385 = smul.addr %s384, 4
          %s386 = scalar_lea.vmem [#allocation2], %s385
          %388 = vsyncadd %s383, 0
          %s389 = smul.addr %s27, 4
          %s390 = scalar_lea.hbm %s1, %s389
          %s392 = sshll.u32 %s390, 4
          %s393 = int_to_ptr.hbm [resolvable:$true] %s392
          %s394 = sshll.u32 %s386, 4
          %s395 = int_to_ptr.vmem [resolvable:$true] %s394
          %397 = dma.hbm_to_vmem [thread:$0]  %s393, 64, %s395, %s383
        $region56: #{tpu_custom_call.1} parent=47 // pred_fallthru
          _
        // Predicated region
        $region57: #{tpu_custom_call.1} parent=47 // pred_check
          %p398 = pneg %p99
        $region58: #{tpu_custom_call.1} parent=47 // pred_check_branch
          %400 = sbr.rel (%p398) target = $region60
        $region59: #{tpu_custom_call.1} parent=47 // pred_region
          %s401 = sand.u32 %s27, 1
          %s402 = scalar_lea.sflag [#allocation6], %s401
          %s403 = sand.u32 %s89, 1
          %s404 = smul.addr %s403, 4
          %s405 = scalar_lea.vmem [#allocation5], %s404
          %407 = vsyncadd %s402, 0
          %s408 = smul.addr %s27, 4
          %s409 = scalar_lea.hbm %s2, %s408
          %s411 = sshll.u32 %s409, 4
          %s412 = int_to_ptr.hbm [resolvable:$true] %s411
          %s413 = sshll.u32 %s405, 4
          %s414 = int_to_ptr.vmem [resolvable:$true] %s413
          %416 = dma.hbm_to_vmem [thread:$0]  %s412, 64, %s414, %s402
        $region60: #{tpu_custom_call.1} parent=47 // pred_fallthru
          _
      $region48: #{tpu_custom_call.1} parent=5 // pred_fallthru
        _
      %p417 = scmp.le.s32.totalorder 1, %s27
      %p418 = scmp.lt.s32.totalorder %s27, 3
      %p419 = pnand %p417, %p418
      %p420 = pneg %p419
      // Predicated region
      $region61: #{tpu_custom_call.1} parent=5 // pred_check
        _
      $region62: #{tpu_custom_call.1} parent=5 // pred_check_branch
        %422 = sbr.rel (%p419) target = $region64
      $region63: #{tpu_custom_call.1} parent=5 // pred_region
        %s423 = ssub.s32 %s27, 1
        %s424 = sand.u32 %s66, 1
        %s425 = scalar_lea.sflag [#allocation3], %s424
        %s426 = sand.u32 %s66, 1
        %s427 = smul.addr %s426, 4
        %s428 = scalar_lea.vmem [#allocation2], %s427
        // Predicated region
        $region65: #{tpu_custom_call.1} parent=63 // pred_check
          %p429 = pneg %p79
        $region66: #{tpu_custom_call.1} parent=63 // pred_check_branch
          %431 = sbr.rel (%p429) target = $region68
        $region67: #{tpu_custom_call.1} parent=63 // pred_region
          %433 = dma.done %s425, 64
        $region68: #{tpu_custom_call.1} parent=63 // pred_fallthru
          _
        %s434 = sand.u32 %s32, 1
        %s435 = scalar_lea.sflag [#allocation6], %s434
        %s436 = sand.u32 %s92, 1
        %s437 = smul.addr %s436, 4
        %s438 = scalar_lea.vmem [#allocation5], %s437
        // Predicated region
        $region69: #{tpu_custom_call.1} parent=63 // pred_check
          %p439 = pneg %p105
        $region70: #{tpu_custom_call.1} parent=63 // pred_check_branch
          %441 = sbr.rel (%p439) target = $region72
        $region71: #{tpu_custom_call.1} parent=63 // pred_region
          %443 = dma.done %s435, 64
        $region72: #{tpu_custom_call.1} parent=63 // pred_fallthru
          _
        // Predicated region
        $region73: #{tpu_custom_call.1} parent=63 // pred_check
          %p444 = pneg %p147
        $region74: #{tpu_custom_call.1} parent=63 // pred_check_branch
          %446 = sbr.rel (%p444) target = $region76
        $region75: #{tpu_custom_call.1} parent=63 // pred_region
          %448 = dma.done [#allocation6], 16
        $region76: #{tpu_custom_call.1} parent=63 // pred_fallthru
          _
        // Predicated region
        $region77: #{tpu_custom_call.1} parent=63 // pred_check
          %p449 = pneg %p168
        $region78: #{tpu_custom_call.1} parent=63 // pred_check_branch
          %451 = sbr.rel (%p449) target = $region80
        $region79: #{tpu_custom_call.1} parent=63 // pred_region
          %453 = dma.done [#allocation9], 256
        $region80: #{tpu_custom_call.1} parent=63 // pred_fallthru
          _
        // Predicated region
        $region81: #{tpu_custom_call.1} parent=63 // pred_check
          %p454 = pneg %p210
        $region82: #{tpu_custom_call.1} parent=63 // pred_check_branch
          %456 = sbr.rel (%p454) target = $region84
        $region83: #{tpu_custom_call.1} parent=63 // pred_region
          %458 = dma.done [#allocation9], 256
        $region84: #{tpu_custom_call.1} parent=63 // pred_fallthru
          _
        %p459 = scmp.lt.s32.totalorder %s32, 1
        %s460 = scalar_select %p459, %s32, 1
        %s461 = scalar_lea.vmem %s0, %s460
        %p462 = pneg %p53
        %p463 = pneg %p50
        %s464 = sand.u32 %s66, 1
        %s465 = scalar_lea.sflag [#allocation3], %s464
        %s466 = sand.u32 %s66, 1
        %s467 = smul.addr %s466, 4
        %s468 = scalar_lea.vmem [#allocation2], %s467
        %p469 = pneg %p79
        %p470 = pneg %p76
        %s471 = sand.u32 %s32, 1
        %s472 = scalar_lea.sflag [#allocation6], %s471
        %s473 = sand.u32 %s92, 1
        %s474 = smul.addr %s473, 4
        %s475 = scalar_lea.vmem [#allocation5], %s474
        %p476 = pneg %p105
        %p477 = pneg %p102
        %p478 = pneg %p126
        %p479 = pneg %p123
        %p480 = pneg %p147
        %p481 = pneg %p144
        %p482 = pneg %p168
        %p483 = pneg %p165
        %p484 = pneg %p189
        %p485 = pneg %p186
        %p486 = pneg %p210
        %p487 = pneg %p207
        %p488 = pneg %p231
        %p489 = pneg %p228
        %p490 = pneg %p252
        %p491 = pneg %p249
        %p492 = pneg %p273
        %p493 = pneg %p270
        %p494 = pneg %p299
        %p495 = pneg %p296
        %s496 = sand.u32 %s286, 1
        %s497 = scalar_lea.sflag [#allocation4], %s496
        %s498 = sand.u32 %s286, 1
        %s499 = smul.addr %s498, 8
        %s500 = scalar_lea.vmem [#allocation11], %s499
        %p501 = scmp.lt.s32.totalorder %s32, 1
        %s502 = scalar_select %p501, %s32, 1
        %s503 = scalar_lea.vmem %s0, %s502
        %v505 = vld [vmem:[%s428] sm:$0xf]
        %v506 = vld [vmem:[%s438] sm:$0xf]
        %v507 = vld [vmem:[%s3] sm:$0xf]
        %v508 = vld [vmem:[%s3 + $0x4] sm:$0xf]
        %v509 = vld [vmem:[%s3 + $0x8] sm:$0xf]
        %v510 = vld [vmem:[%s3 + $0xc] sm:$0xf]
        %v511 = vld [vmem:[#allocation7] sm:$0x1]
        %v513 = vperm.slane %v511, 0
        %v519 = vunpack.c.l.b16 %v507
        %v520 = vunpack.c.l.b16 %v508
        %v521 = vunpack.c.l.b16 %v509
        %v522 = vunpack.c.l.b16 %v510
        %v523 = vpack.c.b16 %v520, %v519
        %v524 = vpack.c.b16 %v522, %v521
        %vm527 = vcmask 261120
        %v529 = vsel %vm527, %v505, 0
        %531 = vmatpush.bf16.msra.mxu0 0
        %532 = vmatpush.bf16.msra.mxu0 0
        %533 = vmatpush.bf16.msra.mxu0 0
        %534 = vmatpush.bf16.msra.mxu0 0
        %535 = vmatpush.bf16.msra.mxu0 0
        %536 = vmatpush.bf16.msra.mxu0 0
        %537 = vmatpush.bf16.msra.mxu0 %v524
        %538 = vmatpush.bf16.msra.mxu0 %v523
        %539 = vmatmul.bf16.gmra.mxu0 %v529
        %v540 = vpop.f32.mrf.mxu0
        %v541 = vadd.f32 %v513, %v540
        %v542 = vpop.f32.mrf.mxu0
        %543 = vdwg.mxu0
        %v544 = vld [vmem:[#allocation8] sm:$0xf]
        %v545 = vld [vmem:[#allocation8 + $0x4] sm:$0xf]
        %v546 = vld [vmem:[#allocation8 + $0x8] sm:$0xf]
        %v547 = vld [vmem:[#allocation8 + $0xc] sm:$0xf]
        %v548 = vld [vmem:[%s6] sm:$0x1]
        %v550 = vperm.slane %v548, 0
        %v556 = vunpack.c.l.b16 %v544
        %v557 = vunpack.c.l.b16 %v545
        %v558 = vunpack.c.l.b16 %v546
        %v559 = vunpack.c.l.b16 %v547
        %v560 = vpack.c.b16 %v557, %v556
        %v561 = vpack.c.b16 %v559, %v558
        %v565 = vsel %vm527, %v506, 0
        %567 = vmatpush.bf16.msra.mxu0 0
        %568 = vmatpush.bf16.msra.mxu0 0
        %569 = vmatpush.bf16.msra.mxu0 0
        %570 = vmatpush.bf16.msra.mxu0 0
        %571 = vmatpush.bf16.msra.mxu0 0
        %572 = vmatpush.bf16.msra.mxu0 0
        %573 = vmatpush.bf16.msra.mxu0 %v561
        %574 = vmatpush.bf16.msra.mxu0 %v560
        %575 = vmatmul.bf16.gmra.mxu0 %v565
        %v576 = vpop.f32.mrf.mxu0
        %v577 = vadd.f32 %v550, %v576
        %v578 = vpop.f32.mrf.mxu0
        %579 = vdwg.mxu0
        %v580 = vld [vmem:[%s503] sm:$0x1]
        %v582 = vperm.slane %v580, 0
        %v584 = vmul.f32 %v541, %v582
        %v585 = vpack.c.bf16 %v584, %v584
        %v586 = vld [vmem:[%s9] sm:$0xf]
        %v587 = vld [vmem:[%s9 + $0x4] sm:$0xf]
        %v588 = vld [vmem:[%s9 + $0x8] sm:$0xf]
        %v589 = vld [vmem:[%s9 + $0xc] sm:$0xf]
        %v594 = vunpack.c.l.b16 %v586
        %v595 = vunpack.c.l.b16 %v587
        %v596 = vunpack.c.l.b16 %v588
        %v597 = vunpack.c.l.b16 %v589
        %v598 = vpack.c.b16 %v595, %v594
        %v599 = vpack.c.b16 %v597, %v596
        %v603 = vsel %vm527, %v585, 0
        %605 = vmatpush.bf16.msra.mxu0 0
        %606 = vmatpush.bf16.msra.mxu0 0
        %607 = vmatpush.bf16.msra.mxu0 0
        %608 = vmatpush.bf16.msra.mxu0 0
        %609 = vmatpush.bf16.msra.mxu0 0
        %610 = vmatpush.bf16.msra.mxu0 0
        %611 = vmatpush.bf16.msra.mxu0 %v599
        %612 = vmatpush.bf16.msra.mxu0 %v598
        %613 = vmatmul.bf16.gmra.mxu0 %v603
        %v614 = vpop.f32.mrf.mxu0
        %v615 = vadd.f32 0.0, %v614
        %v616 = vpop.f32.mrf.mxu0
        %617 = vdwg.mxu0
        %vm618 = vcmask 31744
        %v619 = vsel %vm618, %v615, -inf
        %v620 = vrot.slane %v619, 4
        %v621 = vmax.f32 %v619, %v620
        %v622 = vrot.slane %v621, 2
        %v623 = vmax.f32 %v621, %v622
        %v624 = vrot.slane %v623, 1
        %v625 = vmax.f32 %v623, %v624
        %v626 = vsub.f32 %v615, %v625
        %v627 = vmul.f32 %v626, 1.442695
        %v628 = vpow.pop %v627
        %v629 = vsel %vm618, %v628, 0.0
        %v630 = vrot.slane %v629, 4
        %v631 = vadd.f32 %v629, %v630
        %v632 = vrot.slane %v631, 2
        %v633 = vadd.f32 %v631, %v632
        %v634 = vrot.slane %v633, 1
        %v635 = vadd.f32 %v633, %v634
        %v636 = vrcp.pop %v635
        %v637 = vmul.f32 %v628, %v636
        %v638 = vpack.c.bf16 %v637, %v637
        %v639 = vld [vmem:[%s10] sm:$0x3]
        %v641 = vsel %vm618, %v638, 0
        %vm643 = vcmask 1041408
        %v645 = vsel %vm643, %v639, 0
        %647 = vmatpush.bf16.msra.mxu0 0
        %648 = vmatpush.bf16.msra.mxu0 0
        %649 = vmatpush.bf16.msra.mxu0 0
        %650 = vmatpush.bf16.msra.mxu0 0
        %651 = vmatpush.bf16.msra.mxu0 0
        %652 = vmatpush.bf16.msra.mxu0 0
        %653 = vmatpush.bf16.msra.mxu0 0
        %654 = vmatpush.bf16.msra.mxu0 %v645
        %655 = vmatmul.bf16.gmra.mxu0 %v641
        %v656 = vpop.f32.mrf.mxu0
        %v657 = vadd.f32 0.0, %v656
        %v658 = vpop.f32.mrf.mxu0
        %659 = vdwg.mxu0
        %v660 = vmul.f32 %v657, %v577
        %v661 = vpack.c.bf16 %v660, %v660
        %v662 = vld [vmem:[#allocation10] sm:$0xf]
        %v663 = vld [vmem:[#allocation10 + $0x4] sm:$0xf]
        %v664 = vld [vmem:[#allocation10 + $0x8] sm:$0xf]
        %v665 = vld [vmem:[#allocation10 + $0xc] sm:$0xf]
        %v666 = vld [vmem:[%s8] sm:$0x1]
        %v668 = vperm.slane %v666, 0
        %v674 = vunpack.c.l.b16 %v662
        %v675 = vunpack.c.l.b16 %v663
        %v676 = vunpack.c.l.b16 %v664
        %v677 = vunpack.c.l.b16 %v665
        %v678 = vpack.c.b16 %v675, %v674
        %v679 = vpack.c.b16 %v677, %v676
        %v683 = vsel %vm527, %v661, 0
        %685 = vmatpush.bf16.msra.mxu0 0
        %686 = vmatpush.bf16.msra.mxu0 0
        %687 = vmatpush.bf16.msra.mxu0 0
        %688 = vmatpush.bf16.msra.mxu0 0
        %689 = vmatpush.bf16.msra.mxu0 0
        %690 = vmatpush.bf16.msra.mxu0 0
        %691 = vmatpush.bf16.msra.mxu0 %v679
        %692 = vmatpush.bf16.msra.mxu0 %v678
        %693 = vmatmul.bf16.gmra.mxu0 %v683
        %v694 = vpop.f32.mrf.mxu0
        %v695 = vadd.f32 %v668, %v694
        %v696 = vpop.f32.mrf.mxu0
        %697 = vdwg.mxu0
        %698 = vst.msk [vmem:[%s500] sm:$0xff] %vm527, %v695
        %s699 = sand.u32 %s286, 1
        %s700 = scalar_lea.sflag [#allocation4], %s699
        %s701 = sand.u32 %s286, 1
        %s702 = smul.addr %s701, 8
        %s703 = scalar_lea.vmem [#allocation11], %s702
        // Predicated region
        $region85: #{tpu_custom_call.1} parent=63 // pred_check
          %p704 = pneg %p296
        $region86: #{tpu_custom_call.1} parent=63 // pred_check_branch
          %706 = sbr.rel (%p704) target = $region88
        $region87: #{tpu_custom_call.1} parent=63 // pred_region
          %708 = vsyncadd %s700, 0
          %s709 = smul.addr %s32, 8
          %s710 = scalar_lea.hbm %s11, %s709
          %s712 = sshll.u32 %s703, 4
          %s713 = int_to_ptr.vmem [resolvable:$true] %s712
          %s714 = sshll.u32 %s710, 4
          %s715 = int_to_ptr.hbm [resolvable:$true] %s714
          %717 = dma.vmem_to_hbm [thread:$0]  %s713, 128, %s715, %s700
        $region88: #{tpu_custom_call.1} parent=63 // pred_fallthru
          _
      $region64: #{tpu_custom_call.1} parent=5 // pred_fallthru
        _
      %p718 = scmp.le.s32.totalorder 2, %s27
      // Predicated region
      $region89: #{tpu_custom_call.1} parent=5 // pred_check
        %p719 = pneg %p718
      $region90: #{tpu_custom_call.1} parent=5 // pred_check_branch
        %721 = sbr.rel (%p719) target = $region92
      $region91: #{tpu_custom_call.1} parent=5 // pred_region
        %s722 = ssub.s32 %s27, 2
        // Predicated region
        $region93: #{tpu_custom_call.1} parent=91 // pred_check
          %p723 = pneg %p302
        $region94: #{tpu_custom_call.1} parent=91 // pred_check_branch
          %725 = sbr.rel (%p723) target = $region96
        $region95: #{tpu_custom_call.1} parent=91 // pred_region
          %s726 = sand.u32 %s287, 1
          %s727 = scalar_lea.sflag [#allocation4], %s726
          %s728 = sand.u32 %s287, 1
          %s729 = smul.addr %s728, 8
          %s730 = scalar_lea.vmem [#allocation11], %s729
          %732 = dma.done %s727, 128
        $region96: #{tpu_custom_call.1} parent=91 // pred_fallthru
          _
      $region92: #{tpu_custom_call.1} parent=5 // pred_fallthru
        _
    $region6: #{tpu_custom_call.1} parent=1 // loop_footer
      %s31 = sadd.s32 1, %s27
    $region7: #{tpu_custom_call.1} parent=1 // loop_footer_branch
      %26 = sbr.rel target = $region3
    $region8: #{tpu_custom_call.1} parent=1 // loop_exit
      _
    %733 = vsyncpa [#allocation3], 1
    %s734 = scalar_lea.sflag [#allocation3], 1
    %735 = vsyncpa %s734, 1
    %736 = vsyncpa [#allocation6], 1
    %s737 = scalar_lea.sflag [#allocation6], 1
    %738 = vsyncpa %s737, 1
    %739 = vsyncpa [#allocation9], 1
    %740 = vsyncpa [#allocation4], 1
    %s741 = scalar_lea.sflag [#allocation4], 1
    %742 = vsyncpa %s741, 1

</llo_original>
